<compile_context>
chip_gen: v5e
topology: v5e:2x2
jax: 0.10.0
libtpu: 0.0.40
codegen_flags: <defaults>
</compile_context>

<pallas_src>
import jax
import jax.numpy as jnp
from jax.experimental import pallas as pl
from jax.experimental.pallas import tpu as pltpu

NUM_CLASSES = 10
GRAD_LAYERS = ("conv2_x", "conv3_x", "conv4_x", "conv5_x")
C_IN, C2, C3, C4, C5 = 3, 8, 16, 32, 32
LANE = 128


def _round_up(x, m):
    return ((x + m - 1) // m) * m


# ----------------------------------------------------------------------------
# Fused Pallas kernel: Grad-CAM saliency for all 4 hooked layers of 1 sample.
#   hooked backward feature = s * grad          (backward seeded with s)
#   weights  = spatial_mean(relu(s * grad))                       (C,)
#   saliency = relu(sum_c forward_feature[c] * weights[c])        (HW,)
# The four saliency rows are written into one lane-dense (4, HW_max) slab.
# ----------------------------------------------------------------------------
def _fused_saliency_kernel(s_ref, f2, f3, f4, f5, g2, g3, g4, g5, out_ref):
    s = s_ref[0]                              # backward-seed scalar (SMEM, f32)
    # Zero the packed slab once so padding lanes are deterministic.
    out_ref[...] = jnp.zeros_like(out_ref)

    def one_layer(l, f_ref, g_ref):
        hw = f_ref.shape[2]
        fwd = f_ref[0].astype(jnp.float32)    # (C, HW)
        grad = g_ref[0].astype(jnp.float32)   # (C, HW)

        # ReLU is applied to the *scaled* hooked gradient (s * grad), exactly
        # matching the PyTorch hook semantics (sign of s matters).
        relu_g = jnp.maximum(grad * s, 0.0)   # (C, HW)

        # Spatial mean -> Grad-CAM channel weights, on the MXU:
        #   (1, HW) @ (C, HW)^T  -> (1, C)     (rhs-transposed matmul)
        inv_hw = jnp.full((1, hw), 1.0 / hw, dtype=jnp.float32)
        w_row = jax.lax.dot_general(
            inv_hw, relu_g, (((1,), (1,)), ((), ())),
            preferred_element_type=jnp.float32)           # (1, C)

        # Channel-weighted sum on the MXU, then ReLU:
        #   (1, C) @ (C, HW) -> (1, HW)
        sal = jnp.maximum(
            jnp.dot(w_row, fwd, preferred_element_type=jnp.float32), 0.0)

        out_ref[0, l:l + 1, 0:hw] = sal

    one_layer(0, f2, g2)
    one_layer(1, f3, g3)
    one_layer(2, f4, g4)
    one_layer(3, f5, g5)


def fused_gradcam_saliency(s_val, forward_feats, backward_grads):
    """forward_feats / backward_grads: tuples of 4 NCHW f32 arrays.

    Returns a list of 4 saliency maps with shapes (B, 1, H_l, W_l).
    """
    B = forward_feats[0].shape[0]
    shapes = [f.shape for f in forward_feats]            # (B, C_l, H_l, W_l)
    hws = [h * w for (_, _, h, w) in shapes]
    max_hw = _round_up(max(hws), LANE)                    # lane-dense slab width

    flat_f = [f.reshape(B, f.shape[1], -1) for f in forward_feats]
    flat_g = [g.reshape(B, g.shape[1], -1) for g in backward_grads]
    s_arr = jnp.reshape(s_val, (1,)).astype(jnp.float32)

    feat_specs = [
        pl.BlockSpec((1, x.shape[1], x.shape[2]), lambda b: (b, 0, 0))
        for x in flat_f + flat_g
    ]
    in_specs = [pl.BlockSpec(memory_space=pltpu.MemorySpace.SMEM)] + feat_specs

    packed = pl.pallas_call(
        _fused_saliency_kernel,
        out_shape=jax.ShapeDtypeStruct((B, 4, max_hw), jnp.float32),
        grid=(B,),
        in_specs=in_specs,
        out_specs=pl.BlockSpec((1, 4, max_hw), lambda b: (b, 0, 0)),
        compiler_params=pltpu.CompilerParams(
            dimension_semantics=("parallel",)),
    )(s_arr, *flat_f, *flat_g)

    sal_maps = []
    for l, ((_, _, h, w), hw) in enumerate(zip(shapes, hws)):
        sal_maps.append(packed[:, l, :hw].reshape(B, 1, h, w))
    return sal_maps


# ----------------------------------------------------------------------------
# Synthetic backbone (stands in for the external `model` argument).
# 1x1 convs + 2x2 average pooling, four stages named after grad_layers.
# ----------------------------------------------------------------------------
def init_params():
    key = jax.random.PRNGKey(42)
    ks = jax.random.split(key, 5)

    def w(k, shape, fan_in):
        return jax.random.normal(k, shape, jnp.float32) / jnp.sqrt(float(fan_in))

    return {
        "w2": w(ks[0], (C2, C_IN), C_IN),
        "w3": w(ks[1], (C3, C2), C2),
        "w4": w(ks[2], (C4, C3), C3),
        "w5": w(ks[3], (C5, C4), C4),
        "wfc": w(ks[4], (C5, NUM_CLASSES), C5),
        "bfc": jnp.zeros((NUM_CLASSES,), jnp.float32),
    }


def _conv1x1(x, w):
    # x: (B, Cin, H, W), w: (Cout, Cin) -> (B, Cout, H, W)
    return jnp.einsum("oc,bchw->bohw", w, x)


def _avgpool2(x):
    B, C, H, W = x.shape
    return x.reshape(B, C, H // 2, 2, W // 2, 2).mean(axis=(3, 5))


def backbone(params, images, deltas):
    # deltas are zero perturbations added at each hooked layer so that the
    # gradient w.r.t. them equals the gradient w.r.t. the layer output
    # (replicates the PyTorch backward hooks).
    f2 = jax.nn.relu(_conv1x1(images, params["w2"])) + deltas[0]           # conv2_x
    f3 = jax.nn.relu(_conv1x1(_avgpool2(f2), params["w3"])) + deltas[1]    # conv3_x
    f4 = jax.nn.relu(_conv1x1(_avgpool2(f3), params["w4"])) + deltas[2]    # conv4_x
    f5 = jax.nn.relu(_conv1x1(_avgpool2(f4), params["w5"])) + deltas[3]    # conv5_x
    pooled = f5.mean(axis=(2, 3))                                          # (B, C5)
    logits = pooled @ params["wfc"] + params["bfc"]                        # (B, NUM_CLASSES)
    return logits, (f2, f3, f4, f5)


def _feature_shapes(B, H, W):
    return (
        (B, C2, H, W),
        (B, C3, H // 2, W // 2),
        (B, C4, H // 4, W // 4),
        (B, C5, H // 8, W // 8),
    )


# ----------------------------------------------------------------------------
# SFOCUS forward (dataset == 'ImageNet' branch)
# ----------------------------------------------------------------------------
@jax.jit
def sfocus_forward(params, images, labels):
    B, _, H, W = images.shape
    deltas0 = tuple(jnp.zeros(s, jnp.float32) for s in _feature_shapes(B, H, W))

    # _to_ohe(labels)
    ohe = jax.nn.one_hot(labels, NUM_CLASSES, dtype=jnp.float32)

    # populate_grads: grad_logits = sum(logits * labels_ohe); the backward is
    # seeded with grad_logits itself, so every hooked gradient is the raw grad
    # scaled by the (batch-summed) scalar grad_logits.  The scaling is folded
    # into the Pallas kernel (relu(s*g) computed in-kernel).
    # TODO(synk): PyTorch autograd hooks have no Pallas equivalent; gradients
    # are obtained with jax.value_and_grad in plain JAX (glue), not in-kernel.
    def scalar_fn(deltas):
        logits, feats = backbone(params, images, deltas)
        s = jnp.sum(logits * ohe)
        return s, (logits, feats)

    (s_val, (logits, feats)), grads = jax.value_and_grad(
        scalar_fn, has_aux=True
    )(deltas0)

    # ImageNet branch: top-2, swap prediction if it equals the label
    # (kept for fidelity; unused by the saliency computation, as in PyTorch).
    _, idx = jax.lax.top_k(logits, 2)
    preds, seconds = idx[:, 0], idx[:, 1]
    preds = jnp.where(preds == labels, seconds, preds)

    # Grad-CAM saliency for all hooked layers -- single fused Pallas call.
    saliency_maps = fused_gradcam_saliency(s_val, feats, grads)
    return logits, saliency_maps, preds


if __name__ == "__main__":
    key = jax.random.PRNGKey(0)
    k_img, k_lbl = jax.random.split(key)
    images = jax.random.normal(k_img, (2, C_IN, 32, 32), jnp.float32)
    labels = jax.random.randint(k_lbl, (2,), 0, NUM_CLASSES)

    params = init_params()
    logits, sal_maps, preds = sfocus_forward(params, images, labels)
    (logits, sal_maps, preds) = jax.block_until_ready((logits, sal_maps, preds))

    assert logits.shape == (2, NUM_CLASSES)
    expected_shapes = [(2, 1, 32, 32), (2, 1, 16, 16), (2, 1, 8, 8), (2, 1, 4, 4)]
    for name, sal, exp in zip(GRAD_LAYERS, sal_maps, expected_shapes):
        assert sal.shape == exp, (name, sal.shape, exp)
        assert bool(jnp.all(sal >= 0.0)), name  # ReLU'd saliency
        assert bool(jnp.all(jnp.isfinite(sal))), name

    print("KERNEL_OK")
</pallas_src>

<mosaic_0001>
module attributes {stable_mosaic.version = 11 : i64} {
  func.func @_fused_saliency_kernel(%arg0: i32, %arg1: memref<1xf32, #tpu.memory_space<smem>>, %arg2: memref<1x8x1024xf32, #tpu.memory_space<vmem>>, %arg3: memref<1x16x256xf32, #tpu.memory_space<vmem>>, %arg4: memref<1x32x64xf32, #tpu.memory_space<vmem>>, %arg5: memref<1x32x16xf32, #tpu.memory_space<vmem>>, %arg6: memref<1x8x1024xf32, #tpu.memory_space<vmem>>, %arg7: memref<1x16x256xf32, #tpu.memory_space<vmem>>, %arg8: memref<1x32x64xf32, #tpu.memory_space<vmem>>, %arg9: memref<1x32x16xf32, #tpu.memory_space<vmem>>, %arg10: memref<1x4x1024xf32, #tpu.memory_space<vmem>>) attributes {dimension_semantics = [#tpu.dimension_semantics<parallel>], iteration_bounds = array<i64: 2>, scalar_prefetch = 0 : i64, scratch_operands = 0 : i64, tpu.core_type = #tpu.core_type<tc>, window_params = [{transform_indices = @transform_0, window_bounds = array<i64: 1>}, {transform_indices = @transform_1, window_bounds = array<i64: 1, 8, 1024>}, {transform_indices = @transform_2, window_bounds = array<i64: 1, 16, 256>}, {transform_indices = @transform_3, window_bounds = array<i64: 1, 32, 64>}, {transform_indices = @transform_4, window_bounds = array<i64: 1, 32, 16>}, {transform_indices = @transform_5, window_bounds = array<i64: 1, 8, 1024>}, {transform_indices = @transform_6, window_bounds = array<i64: 1, 16, 256>}, {transform_indices = @transform_7, window_bounds = array<i64: 1, 32, 64>}, {transform_indices = @transform_8, window_bounds = array<i64: 1, 32, 16>}, {transform_indices = @transform_9, window_bounds = array<i64: 1, 4, 1024>}]} {
    %c0 = arith.constant 0 : index
    %0 = memref.load %arg1[%c0] : memref<1xf32, #tpu.memory_space<smem>>
    %cst = arith.constant 0.000000e+00 : f32
    %1 = vector.broadcast %cst : f32 to vector<1x4x1024xf32>
    %c0_0 = arith.constant 0 : index
    %c0_1 = arith.constant 0 : index
    %c0_2 = arith.constant 0 : index
    %2 = vector.load %arg10[%c0_0, %c0_1, %c0_2] : memref<1x4x1024xf32, #tpu.memory_space<vmem>>, vector<1x4x1024xf32>
    tpu.vector_store %arg10[%c0_0, %c0_1, %c0_2], %1 {strides = array<i32>} : memref<1x4x1024xf32, #tpu.memory_space<vmem>>, vector<1x4x1024xf32>,
    %c0_3 = arith.constant 0 : index
    %c0_4 = arith.constant 0 : index
    %c0_5 = arith.constant 0 : index
    %3 = vector.load %arg2[%c0_3, %c0_4, %c0_5] : memref<1x8x1024xf32, #tpu.memory_space<vmem>>, vector<1x8x1024xf32>
    %4 = vector.shape_cast %3 : vector<1x8x1024xf32> to vector<8x1024xf32>
    %c0_6 = arith.constant 0 : index
    %c0_7 = arith.constant 0 : index
    %c0_8 = arith.constant 0 : index
    %5 = vector.load %arg6[%c0_6, %c0_7, %c0_8] : memref<1x8x1024xf32, #tpu.memory_space<vmem>>, vector<1x8x1024xf32>
    %6 = vector.shape_cast %5 : vector<1x8x1024xf32> to vector<8x1024xf32>
    %7 = vector.broadcast %0 : f32 to vector<8x1024xf32>
    %8 = arith.mulf %6, %7 : vector<8x1024xf32>
    %cst_9 = arith.constant 0.000000e+00 : f32
    %9 = vector.broadcast %cst_9 : f32 to vector<8x1024xf32>
    %10 = arith.maximumf %8, %9 : vector<8x1024xf32>
    %cst_10 = arith.constant 9.765625E-4 : f32
    %11 = vector.broadcast %cst_10 : f32 to vector<1x1024xf32>
    %cst_11 = arith.constant dense<0.000000e+00> : vector<1x8xf32>
    %12 = tpu.matmul %11, %10, %cst_11 {dimension_numbers = #tpu.dot_dimension_numbers<[1], [1], [0], [0], [0, 0, 1, 0], [], []>} : vector<1x1024xf32>, vector<8x1024xf32>, vector<1x8xf32> -> vector<1x8xf32>
    %cst_12 = arith.constant dense<0.000000e+00> : vector<1x1024xf32>
    %13 = tpu.matmul %12, %4, %cst_12 {dimension_numbers = #tpu.dot_dimension_numbers<[1], [0], [0], [1], [0, 0, 1, 1], [], []>} : vector<1x8xf32>, vector<8x1024xf32>, vector<1x1024xf32> -> vector<1x1024xf32>
    %cst_13 = arith.constant 0.000000e+00 : f32
    %14 = vector.broadcast %cst_13 : f32 to vector<1x1024xf32>
    %15 = arith.maximumf %13, %14 : vector<1x1024xf32>
    %c0_14 = arith.constant 0 : index
    %c0_15 = arith.constant 0 : index
    %c0_16 = arith.constant 0 : index
    %16 = vector.load %arg10[%c0_14, %c0_15, %c0_16] : memref<1x4x1024xf32, #tpu.memory_space<vmem>>, vector<1x1x1024xf32>
    %17 = vector.shape_cast %16 : vector<1x1x1024xf32> to vector<1x1024xf32>
    %18 = vector.shape_cast %15 : vector<1x1024xf32> to vector<1x1x1024xf32>
    tpu.vector_store %arg10[%c0_14, %c0_15, %c0_16], %18 {strides = array<i32>} : memref<1x4x1024xf32, #tpu.memory_space<vmem>>, vector<1x1x1024xf32>,
    %c0_17 = arith.constant 0 : index
    %c0_18 = arith.constant 0 : index
    %c0_19 = arith.constant 0 : index
    %19 = vector.load %arg3[%c0_17, %c0_18, %c0_19] : memref<1x16x256xf32, #tpu.memory_space<vmem>>, vector<1x16x256xf32>
    %20 = vector.shape_cast %19 : vector<1x16x256xf32> to vector<16x256xf32>
    %c0_20 = arith.constant 0 : index
    %c0_21 = arith.constant 0 : index
    %c0_22 = arith.constant 0 : index
    %21 = vector.load %arg7[%c0_20, %c0_21, %c0_22] : memref<1x16x256xf32, #tpu.memory_space<vmem>>, vector<1x16x256xf32>
    %22 = vector.shape_cast %21 : vector<1x16x256xf32> to vector<16x256xf32>
    %23 = vector.broadcast %0 : f32 to vector<16x256xf32>
    %24 = arith.mulf %22, %23 : vector<16x256xf32>
    %cst_23 = arith.constant 0.000000e+00 : f32
    %25 = vector.broadcast %cst_23 : f32 to vector<16x256xf32>
    %26 = arith.maximumf %24, %25 : vector<16x256xf32>
    %cst_24 = arith.constant 3.906250e-03 : f32
    %27 = vector.broadcast %cst_24 : f32 to vector<1x256xf32>
    %cst_25 = arith.constant dense<0.000000e+00> : vector<1x16xf32>
    %28 = tpu.matmul %27, %26, %cst_25 {dimension_numbers = #tpu.dot_dimension_numbers<[1], [1], [0], [0], [0, 0, 1, 0], [], []>} : vector<1x256xf32>, vector<16x256xf32>, vector<1x16xf32> -> vector<1x16xf32>
    %cst_26 = arith.constant dense<0.000000e+00> : vector<1x256xf32>
    %29 = tpu.matmul %28, %20, %cst_26 {dimension_numbers = #tpu.dot_dimension_numbers<[1], [0], [0], [1], [0, 0, 1, 1], [], []>} : vector<1x16xf32>, vector<16x256xf32>, vector<1x256xf32> -> vector<1x256xf32>
    %cst_27 = arith.constant 0.000000e+00 : f32
    %30 = vector.broadcast %cst_27 : f32 to vector<1x256xf32>
    %31 = arith.maximumf %29, %30 : vector<1x256xf32>
    %c0_28 = arith.constant 0 : index
    %c1 = arith.constant 1 : index
    %c0_29 = arith.constant 0 : index
    %32 = vector.load %arg10[%c0_28, %c1, %c0_29] : memref<1x4x1024xf32, #tpu.memory_space<vmem>>, vector<1x1x256xf32>
    %33 = vector.shape_cast %32 : vector<1x1x256xf32> to vector<1x256xf32>
    %34 = vector.shape_cast %31 : vector<1x256xf32> to vector<1x1x256xf32>
    tpu.vector_store %arg10[%c0_28, %c1, %c0_29], %34 {strides = array<i32>} : memref<1x4x1024xf32, #tpu.memory_space<vmem>>, vector<1x1x256xf32>,
    %c0_30 = arith.constant 0 : index
    %c0_31 = arith.constant 0 : index
    %c0_32 = arith.constant 0 : index
    %35 = vector.load %arg4[%c0_30, %c0_31, %c0_32] : memref<1x32x64xf32, #tpu.memory_space<vmem>>, vector<1x32x64xf32>
    %36 = vector.shape_cast %35 : vector<1x32x64xf32> to vector<32x64xf32>
    %c0_33 = arith.constant 0 : index
    %c0_34 = arith.constant 0 : index
    %c0_35 = arith.constant 0 : index
    %37 = vector.load %arg8[%c0_33, %c0_34, %c0_35] : memref<1x32x64xf32, #tpu.memory_space<vmem>>, vector<1x32x64xf32>
    %38 = vector.shape_cast %37 : vector<1x32x64xf32> to vector<32x64xf32>
    %39 = vector.broadcast %0 : f32 to vector<32x64xf32>
    %40 = arith.mulf %38, %39 : vector<32x64xf32>
    %cst_36 = arith.constant 0.000000e+00 : f32
    %41 = vector.broadcast %cst_36 : f32 to vector<32x64xf32>
    %42 = arith.maximumf %40, %41 : vector<32x64xf32>
    %cst_37 = arith.constant 1.562500e-02 : f32
    %43 = vector.broadcast %cst_37 : f32 to vector<1x64xf32>
    %cst_38 = arith.constant dense<0.000000e+00> : vector<1x32xf32>
    %44 = tpu.matmul %43, %42, %cst_38 {dimension_numbers = #tpu.dot_dimension_numbers<[1], [1], [0], [0], [0, 0, 1, 0], [], []>} : vector<1x64xf32>, vector<32x64xf32>, vector<1x32xf32> -> vector<1x32xf32>
    %cst_39 = arith.constant dense<0.000000e+00> : vector<1x64xf32>
    %45 = tpu.matmul %44, %36, %cst_39 {dimension_numbers = #tpu.dot_dimension_numbers<[1], [0], [0], [1], [0, 0, 1, 1], [], []>} : vector<1x32xf32>, vector<32x64xf32>, vector<1x64xf32> -> vector<1x64xf32>
    %cst_40 = arith.constant 0.000000e+00 : f32
    %46 = vector.broadcast %cst_40 : f32 to vector<1x64xf32>
    %47 = arith.maximumf %45, %46 : vector<1x64xf32>
    %c0_41 = arith.constant 0 : index
    %c2 = arith.constant 2 : index
    %c0_42 = arith.constant 0 : index
    %48 = vector.load %arg10[%c0_41, %c2, %c0_42] : memref<1x4x1024xf32, #tpu.memory_space<vmem>>, vector<1x1x64xf32>
    %49 = vector.shape_cast %48 : vector<1x1x64xf32> to vector<1x64xf32>
    %50 = vector.shape_cast %47 : vector<1x64xf32> to vector<1x1x64xf32>
    tpu.vector_store %arg10[%c0_41, %c2, %c0_42], %50 {strides = array<i32>} : memref<1x4x1024xf32, #tpu.memory_space<vmem>>, vector<1x1x64xf32>,
    %c0_43 = arith.constant 0 : index
    %c0_44 = arith.constant 0 : index
    %c0_45 = arith.constant 0 : index
    %51 = vector.load %arg5[%c0_43, %c0_44, %c0_45] : memref<1x32x16xf32, #tpu.memory_space<vmem>>, vector<1x32x16xf32>
    %52 = vector.shape_cast %51 : vector<1x32x16xf32> to vector<32x16xf32>
    %c0_46 = arith.constant 0 : index
    %c0_47 = arith.constant 0 : index
    %c0_48 = arith.constant 0 : index
    %53 = vector.load %arg9[%c0_46, %c0_47, %c0_48] : memref<1x32x16xf32, #tpu.memory_space<vmem>>, vector<1x32x16xf32>
    %54 = vector.shape_cast %53 : vector<1x32x16xf32> to vector<32x16xf32>
    %55 = vector.broadcast %0 : f32 to vector<32x16xf32>
    %56 = arith.mulf %54, %55 : vector<32x16xf32>
    %cst_49 = arith.constant 0.000000e+00 : f32
    %57 = vector.broadcast %cst_49 : f32 to vector<32x16xf32>
    %58 = arith.maximumf %56, %57 : vector<32x16xf32>
    %cst_50 = arith.constant 6.250000e-02 : f32
    %59 = vector.broadcast %cst_50 : f32 to vector<1x16xf32>
    %cst_51 = arith.constant dense<0.000000e+00> : vector<1x32xf32>
    %60 = tpu.matmul %59, %58, %cst_51 {dimension_numbers = #tpu.dot_dimension_numbers<[1], [1], [0], [0], [0, 0, 1, 0], [], []>} : vector<1x16xf32>, vector<32x16xf32>, vector<1x32xf32> -> vector<1x32xf32>
    %cst_52 = arith.constant dense<0.000000e+00> : vector<1x16xf32>
    %61 = tpu.matmul %60, %52, %cst_52 {dimension_numbers = #tpu.dot_dimension_numbers<[1], [0], [0], [1], [0, 0, 1, 1], [], []>} : vector<1x32xf32>, vector<32x16xf32>, vector<1x16xf32> -> vector<1x16xf32>
    %cst_53 = arith.constant 0.000000e+00 : f32
    %62 = vector.broadcast %cst_53 : f32 to vector<1x16xf32>
    %63 = arith.maximumf %61, %62 : vector<1x16xf32>
    %c0_54 = arith.constant 0 : index
    %c3 = arith.constant 3 : index
    %c0_55 = arith.constant 0 : index
    %64 = vector.load %arg10[%c0_54, %c3, %c0_55] : memref<1x4x1024xf32, #tpu.memory_space<vmem>>, vector<1x1x16xf32>
    %65 = vector.shape_cast %64 : vector<1x1x16xf32> to vector<1x16xf32>
    %66 = vector.shape_cast %63 : vector<1x16xf32> to vector<1x1x16xf32>
    tpu.vector_store %arg10[%c0_54, %c3, %c0_55], %66 {strides = array<i32>} : memref<1x4x1024xf32, #tpu.memory_space<vmem>>, vector<1x1x16xf32>,
    return
  }
  func.func @transform_0(%arg0: i32) -> i32 {
    %c0_i32 = arith.constant 0 : i32
    %c0_i32_0 = arith.constant 0 : i32
    return %c0_i32 : i32
  }
  func.func @transform_1(%arg0: i32) -> (i32, i32, i32) {
    %c0_i32 = arith.constant 0 : i32
    %c0_i32_0 = arith.constant 0 : i32
    %c0_i32_1 = arith.constant 0 : i32
    return %arg0, %c0_i32, %c0_i32_0 : i32, i32, i32
  }
  func.func @transform_2(%arg0: i32) -> (i32, i32, i32) {
    %c0_i32 = arith.constant 0 : i32
    %c0_i32_0 = arith.constant 0 : i32
    %c0_i32_1 = arith.constant 0 : i32
    return %arg0, %c0_i32, %c0_i32_0 : i32, i32, i32
  }
  func.func @transform_3(%arg0: i32) -> (i32, i32, i32) {
    %c0_i32 = arith.constant 0 : i32
    %c0_i32_0 = arith.constant 0 : i32
    %c0_i32_1 = arith.constant 0 : i32
    return %arg0, %c0_i32, %c0_i32_0 : i32, i32, i32
  }
  func.func @transform_4(%arg0: i32) -> (i32, i32, i32) {
    %c0_i32 = arith.constant 0 : i32
    %c0_i32_0 = arith.constant 0 : i32
    %c0_i32_1 = arith.constant 0 : i32
    return %arg0, %c0_i32, %c0_i32_0 : i32, i32, i32
  }
  func.func @transform_5(%arg0: i32) -> (i32, i32, i32) {
    %c0_i32 = arith.constant 0 : i32
    %c0_i32_0 = arith.constant 0 : i32
    %c0_i32_1 = arith.constant 0 : i32
    return %arg0, %c0_i32, %c0_i32_0 : i32, i32, i32
  }
  func.func @transform_6(%arg0: i32) -> (i32, i32, i32) {
    %c0_i32 = arith.constant 0 : i32
    %c0_i32_0 = arith.constant 0 : i32
    %c0_i32_1 = arith.constant 0 : i32
    return %arg0, %c0_i32, %c0_i32_0 : i32, i32, i32
  }
  func.func @transform_7(%arg0: i32) -> (i32, i32, i32) {
    %c0_i32 = arith.constant 0 : i32
    %c0_i32_0 = arith.constant 0 : i32
    %c0_i32_1 = arith.constant 0 : i32
    return %arg0, %c0_i32, %c0_i32_0 : i32, i32, i32
  }
  func.func @transform_8(%arg0: i32) -> (i32, i32, i32) {
    %c0_i32 = arith.constant 0 : i32
    %c0_i32_0 = arith.constant 0 : i32
    %c0_i32_1 = arith.constant 0 : i32
    return %arg0, %c0_i32, %c0_i32_0 : i32, i32, i32
  }
  func.func @transform_9(%arg0: i32) -> (i32, i32, i32) {
    %c0_i32 = arith.constant 0 : i32
    %c0_i32_0 = arith.constant 0 : i32
    %c0_i32_1 = arith.constant 0 : i32
    return %arg0, %c0_i32, %c0_i32_0 : i32, i32, i32
  }
}

</mosaic_0001>

<llo_original>
// kernel: squeeze.11
$region0: #{squeeze.11}
  %s0 = inlined_call_operand.vmem [shape: f32[2,16], index: 0, kind: input, shape index: {}]
  %s1 = inlined_call_operand.hbm [shape: f32[2,1,4,4], index: 1, kind: output, shape index: {}]
  $region1: #{squeeze.11} parent=0
    #allocation0 [shape = 'u8[4096]{0}', space=vmem, size = 0x1000, scoped, tag = 'operand span for operand 1']
    #allocation1 [shape = 's32[1]{0}', space=sflag, size = 0x4, scoped, tag = 'scoped memory for squeeze.11']
    #allocation2 [shape = 'u8[8192]{0}', space=vmem, size = 0x2000, scoped, tag = 'scoped mem for output reshape']
    #allocation3 [shape = 'u8[4096]{0}', space=vmem, size = 0x1000, scoped, tag = 'scoped mem for input reshape']
    %2 = vsyncpa [#allocation1], 0
    %s4 = ssub.s32 4, 1
    %v5 = vld [vmem:[%s0] sm:%s4]
    %6 = vst [vmem:[#allocation3] sm:%s4] %v5
    %v7 = vld [vmem:[#allocation3] sm:$0x3]
    %vm8 = vcmask 31744
    %9 = vst.msk [vmem:[#allocation2] ss:$8 sm:$0x3] %vm8, %v7
    %v10 = vld [vmem:[#allocation3] sm:$0x3]
    %11 = vrot.lane.b32.xlu0 %v10, 124
    %v12 = vpop.permute.xlu0 %11
    %vm13 = vcmask 31744
    %s14 = scalar_lea.vmem [#allocation2], 1
    %15 = vst.msk [vmem:[%s14] ss:$8 sm:$0x3] %vm13, %v12
    %v16 = vld [vmem:[#allocation3] sm:$0x3]
    %17 = vrot.lane.b32.xlu0 %v16, 120
    %v18 = vpop.permute.xlu0 %17
    %vm19 = vcmask 31744
    %s20 = scalar_lea.vmem [#allocation2], 2
    %21 = vst.msk [vmem:[%s20] ss:$8 sm:$0x3] %vm19, %v18
    %v22 = vld [vmem:[#allocation3] sm:$0x3]
    %23 = vrot.lane.b32.xlu0 %v22, 116
    %v24 = vpop.permute.xlu0 %23
    %vm25 = vcmask 31744
    %s26 = scalar_lea.vmem [#allocation2], 3
    %27 = vst.msk [vmem:[%s26] ss:$8 sm:$0x3] %vm25, %v24
    %s29 = ssub.s32 16, 1
    %v30 = vld [vmem:[#allocation2] sm:%s29]
    %s32 = ssub.s32 16, 1
    %33 = vst [vmem:[#allocation0] sm:%s32] %v30
    %s34 = scalar_lea.vmem [#allocation2], 8
    %v35 = vld [vmem:[%s34] sm:%s29]
    %s37 = ssub.s32 16, 1
    %s38 = scalar_lea.vmem [#allocation0], 4
    %39 = vst [vmem:[%s38] sm:%s37] %v35
    %41 = vsyncadd [#allocation1], 0
    %s43 = sshll.u32 [#allocation0], 4
    %s44 = int_to_ptr.vmem [resolvable:$true] %s43
    %s45 = sshll.u32 %s1, 4
    %s46 = int_to_ptr.hbm [resolvable:$true] %s45
    %48 = dma.vmem_to_hbm [thread:$0]  %s44, 128, %s46, [#allocation1]
    %50 = dma.done [#allocation1], 128
    %51 = vsyncpa [#allocation1], 1

// kernel: squeeze.10
$region0: #{squeeze.10}
  %s0 = inlined_call_operand.vmem [shape: f32[2,64], index: 0, kind: input, shape index: {}]
  %s1 = inlined_call_operand.hbm [shape: f32[2,1,8,8], index: 1, kind: output, shape index: {}]
  $region1: #{squeeze.10} parent=0
    #allocation0 [shape = 'u8[8192]{0}', space=vmem, size = 0x2000, scoped, tag = 'operand span for operand 1']
    #allocation1 [shape = 's32[1]{0}', space=sflag, size = 0x4, scoped, tag = 'scoped memory for squeeze.10']
    #allocation2 [shape = 'u8[4096]{0}', space=vmem, size = 0x1000, scoped, tag = 'scoped mem for input reshape']
    %2 = vsyncpa [#allocation1], 0
    %s4 = ssub.s32 4, 1
    %v5 = vld [vmem:[%s0] sm:%s4]
    %6 = vst [vmem:[#allocation2] sm:%s4] %v5
    %v7 = vld [vmem:[#allocation2] sm:$0x3]
    %vm8 = vcmask 64512
    %9 = vst.msk [vmem:[#allocation0] ss:$8 sm:$0x3] %vm8, %v7
    %v10 = vld [vmem:[#allocation2] sm:$0x3]
    %11 = vrot.lane.b32.xlu0 %v10, 120
    %v12 = vpop.permute.xlu0 %11
    %vm13 = vcmask 64512
    %s14 = scalar_lea.vmem [#allocation0], 1
    %15 = vst.msk [vmem:[%s14] ss:$8 sm:$0x3] %vm13, %v12
    %v16 = vld [vmem:[#allocation2] sm:$0x3]
    %17 = vrot.lane.b32.xlu0 %v16, 112
    %v18 = vpop.permute.xlu0 %17
    %vm19 = vcmask 64512
    %s20 = scalar_lea.vmem [#allocation0], 2
    %21 = vst.msk [vmem:[%s20] ss:$8 sm:$0x3] %vm19, %v18
    %v22 = vld [vmem:[#allocation2] sm:$0x3]
    %23 = vrot.lane.b32.xlu0 %v22, 104
    %v24 = vpop.permute.xlu0 %23
    %vm25 = vcmask 64512
    %s26 = scalar_lea.vmem [#allocation0], 3
    %27 = vst.msk [vmem:[%s26] ss:$8 sm:$0x3] %vm25, %v24
    %v28 = vld [vmem:[#allocation2] sm:$0x3]
    %29 = vrot.lane.b32.xlu0 %v28, 96
    %v30 = vpop.permute.xlu0 %29
    %vm31 = vcmask 64512
    %s32 = scalar_lea.vmem [#allocation0], 4
    %33 = vst.msk [vmem:[%s32] ss:$8 sm:$0x3] %vm31, %v30
    %v34 = vld [vmem:[#allocation2] sm:$0x3]
    %35 = vrot.lane.b32.xlu0 %v34, 88
    %v36 = vpop.permute.xlu0 %35
    %vm37 = vcmask 64512
    %s38 = scalar_lea.vmem [#allocation0], 5
    %39 = vst.msk [vmem:[%s38] ss:$8 sm:$0x3] %vm37, %v36
    %v40 = vld [vmem:[#allocation2] sm:$0x3]
    %41 = vrot.lane.b32.xlu0 %v40, 80
    %v42 = vpop.permute.xlu0 %41
    %vm43 = vcmask 64512
    %s44 = scalar_lea.vmem [#allocation0], 6
    %45 = vst.msk [vmem:[%s44] ss:$8 sm:$0x3] %vm43, %v42
    %v46 = vld [vmem:[#allocation2] sm:$0x3]
    %47 = vrot.lane.b32.xlu0 %v46, 72
    %v48 = vpop.permute.xlu0 %47
    %vm49 = vcmask 64512
    %s50 = scalar_lea.vmem [#allocation0], 7
    %51 = vst.msk [vmem:[%s50] ss:$8 sm:$0x3] %vm49, %v48
    %53 = vsyncadd [#allocation1], 0
    %s55 = sshll.u32 [#allocation0], 4
    %s56 = int_to_ptr.vmem [resolvable:$true] %s55
    %s57 = sshll.u32 %s1, 4
    %s58 = int_to_ptr.hbm [resolvable:$true] %s57
    %60 = dma.vmem_to_hbm [thread:$0]  %s56, 256, %s58, [#allocation1]
    %62 = dma.done [#allocation1], 256
    %63 = vsyncpa [#allocation1], 1

// kernel: squeeze.9
$region0: #{squeeze.9}
  %s0 = inlined_call_operand.vmem [shape: f32[2,256], index: 0, kind: input, shape index: {}]
  %s1 = inlined_call_operand.hbm [shape: f32[2,1,16,16], index: 1, kind: output, shape index: {}]
  $region1: #{squeeze.9} parent=0
    #allocation0 [shape = 'u8[16384]{0}', space=vmem, size = 0x4000, scoped, tag = 'operand span for operand 1']
    #allocation1 [shape = 's32[1]{0}', space=sflag, size = 0x4, scoped, tag = 'scoped memory for squeeze.9']
    #allocation2 [shape = 'u8[8192]{0}', space=vmem, size = 0x2000, scoped, tag = 'scoped mem for input reshape']
    %2 = vsyncpa [#allocation1], 0
    %s4 = ssub.s32 4, 1
    %s5 = scalar_lea.vmem %s0, 2
    %v6 = vld [vmem:[%s5] sm:%s4]
    %s7 = scalar_lea.vmem [#allocation2], 8
    %8 = vst [vmem:[%s7] sm:%s4] %v6
    %v9 = vld [vmem:[%s0] sm:%s4]
    %10 = vst [vmem:[#allocation2] sm:%s4] %v9
    %v11 = vld [vmem:[#allocation2] sm:$0x3]
    %vm12 = vcmask 130048
    %13 = vst.msk [vmem:[#allocation0] ss:$16 sm:$0x3] %vm12, %v11
    %s14 = scalar_lea.vmem [#allocation2], 8
    %v15 = vld [vmem:[%s14] sm:$0x3]
    %vm16 = vcmask 130048
    %s17 = scalar_lea.vmem [#allocation0], 8
    %18 = vst.msk [vmem:[%s17] ss:$16 sm:$0x3] %vm16, %v15
    %v19 = vld.sshfl [vmem:[#allocation2] sm:$0xff pattern:$0x99999180]
    %20 = vrot.lane.b32.xlu0 %v19, 112
    %v21 = vpop.permute.xlu0 %20
    %vm22 = vcmask 130048
    %s23 = scalar_lea.vmem [#allocation0], 1
    %24 = vst.msk [vmem:[%s23] ss:$8 sm:$0xf] %vm22, %v21
    %v25 = vld.sshfl [vmem:[#allocation2] sm:$0xff pattern:$0x99999180]
    %26 = vrot.lane.b32.xlu0 %v25, 96
    %v27 = vpop.permute.xlu0 %26
    %vm28 = vcmask 130048
    %s29 = scalar_lea.vmem [#allocation0], 2
    %30 = vst.msk [vmem:[%s29] ss:$8 sm:$0xf] %vm28, %v27
    %v31 = vld.sshfl [vmem:[#allocation2] sm:$0xff pattern:$0x99999180]
    %32 = vrot.lane.b32.xlu0 %v31, 80
    %v33 = vpop.permute.xlu0 %32
    %vm34 = vcmask 130048
    %s35 = scalar_lea.vmem [#allocation0], 3
    %36 = vst.msk [vmem:[%s35] ss:$8 sm:$0xf] %vm34, %v33
    %v37 = vld.sshfl [vmem:[#allocation2] sm:$0xff pattern:$0x99999180]
    %38 = vrot.lane.b32.xlu0 %v37, 64
    %v39 = vpop.permute.xlu0 %38
    %vm40 = vcmask 130048
    %s41 = scalar_lea.vmem [#allocation0], 4
    %42 = vst.msk [vmem:[%s41] ss:$8 sm:$0xf] %vm40, %v39
    %v43 = vld.sshfl [vmem:[#allocation2] sm:$0xff pattern:$0x99999180]
    %44 = vrot.lane.b32.xlu0 %v43, 48
    %v45 = vpop.permute.xlu0 %44
    %vm46 = vcmask 130048
    %s47 = scalar_lea.vmem [#allocation0], 5
    %48 = vst.msk [vmem:[%s47] ss:$8 sm:$0xf] %vm46, %v45
    %v49 = vld.sshfl [vmem:[#allocation2] sm:$0xff pattern:$0x99999180]
    %50 = vrot.lane.b32.xlu0 %v49, 32
    %v51 = vpop.permute.xlu0 %50
    %vm52 = vcmask 130048
    %s53 = scalar_lea.vmem [#allocation0], 6
    %54 = vst.msk [vmem:[%s53] ss:$8 sm:$0xf] %vm52, %v51
    %v55 = vld.sshfl [vmem:[#allocation2] sm:$0xff pattern:$0x99999180]
    %56 = vrot.lane.b32.xlu0 %v55, 16
    %v57 = vpop.permute.xlu0 %56
    %vm58 = vcmask 130048
    %s59 = scalar_lea.vmem [#allocation0], 7
    %60 = vst.msk [vmem:[%s59] ss:$8 sm:$0xf] %vm58, %v57
    %62 = vsyncadd [#allocation1], 0
    %s64 = sshll.u32 [#allocation0], 4
    %s65 = int_to_ptr.vmem [resolvable:$true] %s64
    %s66 = sshll.u32 %s1, 4
    %s67 = int_to_ptr.hbm [resolvable:$true] %s66
    %69 = dma.vmem_to_hbm [thread:$0]  %s65, 512, %s67, [#allocation1]
    %71 = dma.done [#allocation1], 512
    %72 = vsyncpa [#allocation1], 1

// kernel: squeeze.8
$region0: #{squeeze.8}
  %s0 = inlined_call_operand.vmem [shape: f32[2,1024], index: 0, kind: input, shape index: {}]
  %s1 = inlined_call_operand.hbm [shape: f32[2,1,32,32], index: 1, kind: output, shape index: {}]
  $region1: #{squeeze.8} parent=0
    #allocation0 [shape = 'u8[32768]{0}', space=vmem, size = 0x8000, scoped, tag = 'operand span for operand 1']
    #allocation1 [shape = 's32[1]{0}', space=sflag, size = 0x4, scoped, tag = 'scoped memory for squeeze.8']
    #allocation2 [shape = 'u8[32768]{0}', space=vmem, size = 0x8000, scoped, tag = 'scoped mem for input reshape']
    %2 = vsyncpa [#allocation1], 0
    %s4 = ssub.s32 4, 1
    %s5 = scalar_lea.vmem %s0, 14
    %v6 = vld [vmem:[%s5] sm:%s4]
    %s7 = scalar_lea.vmem [#allocation2], 56
    %8 = vst [vmem:[%s7] sm:%s4] %v6
    %s9 = scalar_lea.vmem %s0, 12
    %v10 = vld [vmem:[%s9] sm:%s4]
    %s11 = scalar_lea.vmem [#allocation2], 48
    %12 = vst [vmem:[%s11] sm:%s4] %v10
    %s13 = scalar_lea.vmem %s0, 10
    %v14 = vld [vmem:[%s13] sm:%s4]
    %s15 = scalar_lea.vmem [#allocation2], 40
    %16 = vst [vmem:[%s15] sm:%s4] %v14
    %s17 = scalar_lea.vmem %s0, 8
    %v18 = vld [vmem:[%s17] sm:%s4]
    %s19 = scalar_lea.vmem [#allocation2], 32
    %20 = vst [vmem:[%s19] sm:%s4] %v18
    %s21 = scalar_lea.vmem %s0, 6
    %v22 = vld [vmem:[%s21] sm:%s4]
    %s23 = scalar_lea.vmem [#allocation2], 24
    %24 = vst [vmem:[%s23] sm:%s4] %v22
    %s25 = scalar_lea.vmem %s0, 4
    %v26 = vld [vmem:[%s25] sm:%s4]
    %s27 = scalar_lea.vmem [#allocation2], 16
    %28 = vst [vmem:[%s27] sm:%s4] %v26
    %s29 = scalar_lea.vmem %s0, 2
    %v30 = vld [vmem:[%s29] sm:%s4]
    %s31 = scalar_lea.vmem [#allocation2], 8
    %32 = vst [vmem:[%s31] sm:%s4] %v30
    %v33 = vld [vmem:[%s0] sm:%s4]
    %34 = vst [vmem:[#allocation2] sm:%s4] %v33
    %v35 = vld [vmem:[#allocation2] sm:$0x3]
    %vm36 = vcmask 261120
    %37 = vst.msk [vmem:[#allocation0] sm:$0x1] %vm36, %v35
    %s38 = scalar_lea.vmem [#allocation0], 31
    %39 = vst.msk [vmem:[%s38] sm:$0x2] %vm36, %v35
    %s40 = scalar_lea.vmem [#allocation2], 8
    %v41 = vld [vmem:[%s40] sm:$0x3]
    %vm42 = vcmask 261120
    %s43 = scalar_lea.vmem [#allocation0], 4
    %44 = vst.msk [vmem:[%s43] sm:$0x1] %vm42, %v41
    %s45 = scalar_lea.vmem [#allocation0], 35
    %46 = vst.msk [vmem:[%s45] sm:$0x2] %vm42, %v41
    %s47 = scalar_lea.vmem [#allocation2], 16
    %v48 = vld [vmem:[%s47] sm:$0x3]
    %vm49 = vcmask 261120
    %s50 = scalar_lea.vmem [#allocation0], 8
    %51 = vst.msk [vmem:[%s50] sm:$0x1] %vm49, %v48
    %s52 = scalar_lea.vmem [#allocation0], 39
    %53 = vst.msk [vmem:[%s52] sm:$0x2] %vm49, %v48
    %s54 = scalar_lea.vmem [#allocation2], 24
    %v55 = vld [vmem:[%s54] sm:$0x3]
    %vm56 = vcmask 261120
    %s57 = scalar_lea.vmem [#allocation0], 12
    %58 = vst.msk [vmem:[%s57] sm:$0x1] %vm56, %v55
    %s59 = scalar_lea.vmem [#allocation0], 43
    %60 = vst.msk [vmem:[%s59] sm:$0x2] %vm56, %v55
    %s61 = scalar_lea.vmem [#allocation2], 32
    %v62 = vld [vmem:[%s61] sm:$0x3]
    %vm63 = vcmask 261120
    %s64 = scalar_lea.vmem [#allocation0], 16
    %65 = vst.msk [vmem:[%s64] sm:$0x1] %vm63, %v62
    %s66 = scalar_lea.vmem [#allocation0], 47
    %67 = vst.msk [vmem:[%s66] sm:$0x2] %vm63, %v62
    %s68 = scalar_lea.vmem [#allocation2], 40
    %v69 = vld [vmem:[%s68] sm:$0x3]
    %vm70 = vcmask 261120
    %s71 = scalar_lea.vmem [#allocation0], 20
    %72 = vst.msk [vmem:[%s71] sm:$0x1] %vm70, %v69
    %s73 = scalar_lea.vmem [#allocation0], 51
    %74 = vst.msk [vmem:[%s73] sm:$0x2] %vm70, %v69
    %s75 = scalar_lea.vmem [#allocation2], 48
    %v76 = vld [vmem:[%s75] sm:$0x3]
    %vm77 = vcmask 261120
    %s78 = scalar_lea.vmem [#allocation0], 24
    %79 = vst.msk [vmem:[%s78] sm:$0x1] %vm77, %v76
    %s80 = scalar_lea.vmem [#allocation0], 55
    %81 = vst.msk [vmem:[%s80] sm:$0x2] %vm77, %v76
    %s82 = scalar_lea.vmem [#allocation2], 56
    %v83 = vld [vmem:[%s82] sm:$0x3]
    %vm84 = vcmask 261120
    %s85 = scalar_lea.vmem [#allocation0], 28
    %86 = vst.msk [vmem:[%s85] sm:$0x1] %vm84, %v83
    %s87 = scalar_lea.vmem [#allocation0], 59
    %88 = vst.msk [vmem:[%s87] sm:$0x2] %vm84, %v83
    %v89 = vld [vmem:[#allocation2] ss:$8 sm:$0xf]
    %v90 = vld [vmem:[#allocation2] ss:$8 sm:$0xf0]
    %vm91 = vcmask 1047556
    %v92 = vsel %vm91, %v90, %v89
    %93 = vrot.lane.b32.xlu0 %v92, 96
    %v94 = vpop.permute.xlu0 %93
    %vm95 = vcmask 261120
    %s96 = scalar_lea.vmem [#allocation0], 1
    %97 = vst.msk [vmem:[%s96] ss:$4 sm:$0xff] %vm95, %v94
    %s98 = scalar_lea.vmem [#allocation2], 1
    %v99 = vld [vmem:[%s98] ss:$8 sm:$0xf]
    %s100 = scalar_lea.vmem [#allocation2], 1
    %v101 = vld [vmem:[%s100] ss:$8 sm:$0xf0]
    %vm102 = vcmask 1047556
    %v103 = vsel %vm102, %v101, %v99
    %104 = vrot.lane.b32.xlu0 %v103, 96
    %v105 = vpop.permute.xlu0 %104
    %vm106 = vcmask 261120
    %s107 = scalar_lea.vmem [#allocation0], 33
    %108 = vst.msk [vmem:[%s107] ss:$4 sm:$0xff] %vm106, %v105
    %v109 = vld [vmem:[#allocation2] ss:$8 sm:$0xf]
    %v110 = vld [vmem:[#allocation2] ss:$8 sm:$0xf0]
    %vm111 = vcmask 1047556
    %v112 = vsel %vm111, %v110, %v109
    %113 = vrot.lane.b32.xlu0 %v112, 64
    %v114 = vpop.permute.xlu0 %113
    %vm115 = vcmask 261120
    %s116 = scalar_lea.vmem [#allocation0], 2
    %117 = vst.msk [vmem:[%s116] ss:$4 sm:$0xff] %vm115, %v114
    %s118 = scalar_lea.vmem [#allocation2], 1
    %v119 = vld [vmem:[%s118] ss:$8 sm:$0xf]
    %s120 = scalar_lea.vmem [#allocation2], 1
    %v121 = vld [vmem:[%s120] ss:$8 sm:$0xf0]
    %vm122 = vcmask 1047556
    %v123 = vsel %vm122, %v121, %v119
    %124 = vrot.lane.b32.xlu0 %v123, 64
    %v125 = vpop.permute.xlu0 %124
    %vm126 = vcmask 261120
    %s127 = scalar_lea.vmem [#allocation0], 34
    %128 = vst.msk [vmem:[%s127] ss:$4 sm:$0xff] %vm126, %v125
    %v129 = vld [vmem:[#allocation2] ss:$8 sm:$0xf]
    %v130 = vld [vmem:[#allocation2] ss:$8 sm:$0xf0]
    %vm131 = vcmask 1047556
    %v132 = vsel %vm131, %v130, %v129
    %133 = vrot.lane.b32.xlu0 %v132, 32
    %v134 = vpop.permute.xlu0 %133
    %vm135 = vcmask 261120
    %s136 = scalar_lea.vmem [#allocation0], 3
    %137 = vst.msk [vmem:[%s136] ss:$4 sm:$0xff] %vm135, %v134
    %s138 = scalar_lea.vmem [#allocation2], 1
    %v139 = vld [vmem:[%s138] ss:$8 sm:$0xf]
    %s140 = scalar_lea.vmem [#allocation2], 1
    %v141 = vld [vmem:[%s140] ss:$8 sm:$0xf0]
    %vm142 = vcmask 1047556
    %v143 = vsel %vm142, %v141, %v139
    %144 = vrot.lane.b32.xlu0 %v143, 32
    %v145 = vpop.permute.xlu0 %144
    %vm146 = vcmask 261120
    %s147 = scalar_lea.vmem [#allocation0], 35
    %148 = vst.msk [vmem:[%s147] ss:$4 sm:$0xff] %vm146, %v145
    %150 = vsyncadd [#allocation1], 0
    %s152 = sshll.u32 [#allocation0], 4
    %s153 = int_to_ptr.vmem [resolvable:$true] %s152
    %s154 = sshll.u32 %s1, 4
    %s155 = int_to_ptr.hbm [resolvable:$true] %s154
    %157 = dma.vmem_to_hbm [thread:$0]  %s153, 1024, %s155, [#allocation1]
    %159 = dma.done [#allocation1], 1024
    %160 = vsyncpa [#allocation1], 1

// kernel: sfocus_forward.1
$region0: #{sfocus_forward.1}
  #allocation0 [shape = 'u32[]', space=smem, size = 0x4, offset = 0x4, fixed_abs, tag = 'smem constant byte address 0x4 - core index']
  #allocation1 [shape = 'u32[72,128]{1,0:T(1,128)}', space=vmem, size = 0x9000, scoped, tag = 'internal scratch']
  #allocation2 [shape = 'f32[1]{0:T(128)S(6)}', space=smem, size = 0x200, scoped, tag = 'scoped memory for sfocus_forward.1']
  %s0 = inlined_call_operand.<no memory space> [shape: f32[1], index: 0, kind: input, shape index: {}]
  %s1 = inlined_call_operand.vmem [shape: f32[2,8,1024], index: 1, kind: input, shape index: {}]
  %s2 = inlined_call_operand.vmem [shape: f32[2,16,256], index: 2, kind: input, shape index: {}]
  %s3 = inlined_call_operand.vmem [shape: f32[2,32,64], index: 3, kind: input, shape index: {}]
  %s4 = inlined_call_operand.vmem [shape: f32[2,32,16], index: 4, kind: input, shape index: {}]
  %s5 = inlined_call_operand.vmem [shape: f32[2,8,1024], index: 5, kind: input, shape index: {}]
  %s6 = inlined_call_operand.vmem [shape: f32[2,16,256], index: 6, kind: input, shape index: {}]
  %s7 = inlined_call_operand.vmem [shape: f32[2,32,64], index: 7, kind: input, shape index: {}]
  %s8 = inlined_call_operand.vmem [shape: f32[2,32,16], index: 8, kind: input, shape index: {}]
  %s9 = inlined_call_operand.vmem [shape: f32[2,4,1024], index: 9, kind: output, shape index: {}]
  %s10 = sld [smem:[#allocation0]]
  $region69: #{sfocus_forward.1} parent=0
    _
  %s12 = ssub.s32 1, %s10
  %s13 = scalar_select 0, %s12, %s10
  %14 = sst [smem:[#allocation2]] %s0
  loop: start=0, step=1, limit=4
  $region2: #{sfocus_forward.1} parent=0 // loop_pre_header
    _
  $region3: #{sfocus_forward.1} parent=0 // loop_header
    %s16 = sphi 0, %s20
    %p17 = scmp.ge.s32.totalorder %s16, 4
    %s24 = sphi 0, %s24
    %s26 = sphi 0, %s24
    %s27 = sphi 0, %s26
    %s41 = sphi 0, %s27
    %s47 = sphi 0, %s49
    %s50 = sphi 0, %s47
    %s51 = sphi 0, %s50
    %s67 = sphi 0, %s51
    %s73 = sphi 0, %s75
    %s76 = sphi 0, %s73
    %s77 = sphi 0, %s76
    %s93 = sphi 0, %s77
    %s99 = sphi 0, %s101
    %s102 = sphi 0, %s99
    %s103 = sphi 0, %s102
    %s119 = sphi 0, %s103
    %s125 = sphi 0, %s127
    %s128 = sphi 0, %s125
    %s129 = sphi 0, %s128
    %s145 = sphi 0, %s129
    %s151 = sphi 0, %s153
    %s154 = sphi 0, %s151
    %s155 = sphi 0, %s154
    %s171 = sphi 0, %s155
    %s177 = sphi 0, %s179
    %s180 = sphi 0, %s177
    %s181 = sphi 0, %s180
    %s197 = sphi 0, %s181
    %s203 = sphi 0, %s205
    %s206 = sphi 0, %s203
    %s207 = sphi 0, %s206
    %s223 = sphi 0, %s207
    %s229 = sphi 0, %s231
    %s232 = sphi 0, %s229
    %s233 = sphi 0, %s232
    %s249 = sphi 0, %s233
    %s255 = sphi 0, %s257
    %s258 = sphi 0, %s255
    %s259 = sphi 0, %s258
    %s275 = sphi 0, %s259
  $region4: #{sfocus_forward.1} parent=0 // loop_header_branch
    %19 = sbr.rel (%p17) target = $region8
  $region5: #{sfocus_forward.1} parent=0 // loop_body
    %s21 = ssub.s32 %s16, 1
    %s22 = ssub.s32 %s16, 2
    %s23 = sadd.s32 %s16, 1
    %s25 = sadd.s32 %s24, 1
    %p28 = scmp.eq.s32.totalorder %s16, 1
    %p29 = scmp.ne.s32.totalorder %s24, %s26
    %p30 = scmp.eq.s32.totalorder %s16, 0
    %p31 = por %p29, %p30
    %p32 = scmp.ne.s32.totalorder %s24, %s26
    %p33 = scmp.eq.s32.totalorder %s21, 1
    %p34 = por %p32, %p33
    %p35 = scmp.ne.s32.totalorder %s26, %s27
    %p36 = scmp.eq.s32.totalorder %s21, 0
    %p37 = por %p35, %p36
    %p38 = scmp.ne.s32.totalorder %s26, %s27
    %p39 = scmp.eq.s32.totalorder %s22, 1
    %p40 = por %p38, %p39
    %p42 = scmp.ne.s32.totalorder %s27, %s41
    %p43 = scmp.eq.s32.totalorder %s22, 0
    %p44 = por %p42, %p43
    %s45 = ssub.s32 %s16, %s23
    %p46 = scmp.eq.s32.totalorder %s45, 0
    %s48 = sadd.s32 %s47, 1
    %s49 = scalar_select %p46, %s47, %s48
    %p52 = pneg %p46
    %p53 = scmp.eq.s32.totalorder %s16, 1
    %p54 = por %p52, %p53
    %p55 = scmp.ne.s32.totalorder %s47, %s50
    %p56 = scmp.eq.s32.totalorder %s16, 0
    %p57 = por %p55, %p56
    %p58 = scmp.ne.s32.totalorder %s47, %s50
    %p59 = scmp.eq.s32.totalorder %s21, 1
    %p60 = por %p58, %p59
    %p61 = scmp.ne.s32.totalorder %s50, %s51
    %p62 = scmp.eq.s32.totalorder %s21, 0
    %p63 = por %p61, %p62
    %p64 = scmp.ne.s32.totalorder %s50, %s51
    %p65 = scmp.eq.s32.totalorder %s22, 1
    %p66 = por %p64, %p65
    %p68 = scmp.ne.s32.totalorder %s51, %s67
    %p69 = scmp.eq.s32.totalorder %s22, 0
    %p70 = por %p68, %p69
    %s71 = ssub.s32 %s16, %s23
    %p72 = scmp.eq.s32.totalorder %s71, 0
    %s74 = sadd.s32 %s73, 1
    %s75 = scalar_select %p72, %s73, %s74
    %p78 = pneg %p72
    %p79 = scmp.eq.s32.totalorder %s16, 1
    %p80 = por %p78, %p79
    %p81 = scmp.ne.s32.totalorder %s73, %s76
    %p82 = scmp.eq.s32.totalorder %s16, 0
    %p83 = por %p81, %p82
    %p84 = scmp.ne.s32.totalorder %s73, %s76
    %p85 = scmp.eq.s32.totalorder %s21, 1
    %p86 = por %p84, %p85
    %p87 = scmp.ne.s32.totalorder %s76, %s77
    %p88 = scmp.eq.s32.totalorder %s21, 0
    %p89 = por %p87, %p88
    %p90 = scmp.ne.s32.totalorder %s76, %s77
    %p91 = scmp.eq.s32.totalorder %s22, 1
    %p92 = por %p90, %p91
    %p94 = scmp.ne.s32.totalorder %s77, %s93
    %p95 = scmp.eq.s32.totalorder %s22, 0
    %p96 = por %p94, %p95
    %s97 = ssub.s32 %s16, %s23
    %p98 = scmp.eq.s32.totalorder %s97, 0
    %s100 = sadd.s32 %s99, 1
    %s101 = scalar_select %p98, %s99, %s100
    %p104 = pneg %p98
    %p105 = scmp.eq.s32.totalorder %s16, 1
    %p106 = por %p104, %p105
    %p107 = scmp.ne.s32.totalorder %s99, %s102
    %p108 = scmp.eq.s32.totalorder %s16, 0
    %p109 = por %p107, %p108
    %p110 = scmp.ne.s32.totalorder %s99, %s102
    %p111 = scmp.eq.s32.totalorder %s21, 1
    %p112 = por %p110, %p111
    %p113 = scmp.ne.s32.totalorder %s102, %s103
    %p114 = scmp.eq.s32.totalorder %s21, 0
    %p115 = por %p113, %p114
    %p116 = scmp.ne.s32.totalorder %s102, %s103
    %p117 = scmp.eq.s32.totalorder %s22, 1
    %p118 = por %p116, %p117
    %p120 = scmp.ne.s32.totalorder %s103, %s119
    %p121 = scmp.eq.s32.totalorder %s22, 0
    %p122 = por %p120, %p121
    %s123 = ssub.s32 %s16, %s23
    %p124 = scmp.eq.s32.totalorder %s123, 0
    %s126 = sadd.s32 %s125, 1
    %s127 = scalar_select %p124, %s125, %s126
    %p130 = pneg %p124
    %p131 = scmp.eq.s32.totalorder %s16, 1
    %p132 = por %p130, %p131
    %p133 = scmp.ne.s32.totalorder %s125, %s128
    %p134 = scmp.eq.s32.totalorder %s16, 0
    %p135 = por %p133, %p134
    %p136 = scmp.ne.s32.totalorder %s125, %s128
    %p137 = scmp.eq.s32.totalorder %s21, 1
    %p138 = por %p136, %p137
    %p139 = scmp.ne.s32.totalorder %s128, %s129
    %p140 = scmp.eq.s32.totalorder %s21, 0
    %p141 = por %p139, %p140
    %p142 = scmp.ne.s32.totalorder %s128, %s129
    %p143 = scmp.eq.s32.totalorder %s22, 1
    %p144 = por %p142, %p143
    %p146 = scmp.ne.s32.totalorder %s129, %s145
    %p147 = scmp.eq.s32.totalorder %s22, 0
    %p148 = por %p146, %p147
    %s149 = ssub.s32 %s16, %s23
    %p150 = scmp.eq.s32.totalorder %s149, 0
    %s152 = sadd.s32 %s151, 1
    %s153 = scalar_select %p150, %s151, %s152
    %p156 = pneg %p150
    %p157 = scmp.eq.s32.totalorder %s16, 1
    %p158 = por %p156, %p157
    %p159 = scmp.ne.s32.totalorder %s151, %s154
    %p160 = scmp.eq.s32.totalorder %s16, 0
    %p161 = por %p159, %p160
    %p162 = scmp.ne.s32.totalorder %s151, %s154
    %p163 = scmp.eq.s32.totalorder %s21, 1
    %p164 = por %p162, %p163
    %p165 = scmp.ne.s32.totalorder %s154, %s155
    %p166 = scmp.eq.s32.totalorder %s21, 0
    %p167 = por %p165, %p166
    %p168 = scmp.ne.s32.totalorder %s154, %s155
    %p169 = scmp.eq.s32.totalorder %s22, 1
    %p170 = por %p168, %p169
    %p172 = scmp.ne.s32.totalorder %s155, %s171
    %p173 = scmp.eq.s32.totalorder %s22, 0
    %p174 = por %p172, %p173
    %s175 = ssub.s32 %s16, %s23
    %p176 = scmp.eq.s32.totalorder %s175, 0
    %s178 = sadd.s32 %s177, 1
    %s179 = scalar_select %p176, %s177, %s178
    %p182 = pneg %p176
    %p183 = scmp.eq.s32.totalorder %s16, 1
    %p184 = por %p182, %p183
    %p185 = scmp.ne.s32.totalorder %s177, %s180
    %p186 = scmp.eq.s32.totalorder %s16, 0
    %p187 = por %p185, %p186
    %p188 = scmp.ne.s32.totalorder %s177, %s180
    %p189 = scmp.eq.s32.totalorder %s21, 1
    %p190 = por %p188, %p189
    %p191 = scmp.ne.s32.totalorder %s180, %s181
    %p192 = scmp.eq.s32.totalorder %s21, 0
    %p193 = por %p191, %p192
    %p194 = scmp.ne.s32.totalorder %s180, %s181
    %p195 = scmp.eq.s32.totalorder %s22, 1
    %p196 = por %p194, %p195
    %p198 = scmp.ne.s32.totalorder %s181, %s197
    %p199 = scmp.eq.s32.totalorder %s22, 0
    %p200 = por %p198, %p199
    %s201 = ssub.s32 %s16, %s23
    %p202 = scmp.eq.s32.totalorder %s201, 0
    %s204 = sadd.s32 %s203, 1
    %s205 = scalar_select %p202, %s203, %s204
    %p208 = pneg %p202
    %p209 = scmp.eq.s32.totalorder %s16, 1
    %p210 = por %p208, %p209
    %p211 = scmp.ne.s32.totalorder %s203, %s206
    %p212 = scmp.eq.s32.totalorder %s16, 0
    %p213 = por %p211, %p212
    %p214 = scmp.ne.s32.totalorder %s203, %s206
    %p215 = scmp.eq.s32.totalorder %s21, 1
    %p216 = por %p214, %p215
    %p217 = scmp.ne.s32.totalorder %s206, %s207
    %p218 = scmp.eq.s32.totalorder %s21, 0
    %p219 = por %p217, %p218
    %p220 = scmp.ne.s32.totalorder %s206, %s207
    %p221 = scmp.eq.s32.totalorder %s22, 1
    %p222 = por %p220, %p221
    %p224 = scmp.ne.s32.totalorder %s207, %s223
    %p225 = scmp.eq.s32.totalorder %s22, 0
    %p226 = por %p224, %p225
    %s227 = ssub.s32 %s16, %s23
    %p228 = scmp.eq.s32.totalorder %s227, 0
    %s230 = sadd.s32 %s229, 1
    %s231 = scalar_select %p228, %s229, %s230
    %p234 = pneg %p228
    %p235 = scmp.eq.s32.totalorder %s16, 1
    %p236 = por %p234, %p235
    %p237 = scmp.ne.s32.totalorder %s229, %s232
    %p238 = scmp.eq.s32.totalorder %s16, 0
    %p239 = por %p237, %p238
    %p240 = scmp.ne.s32.totalorder %s229, %s232
    %p241 = scmp.eq.s32.totalorder %s21, 1
    %p242 = por %p240, %p241
    %p243 = scmp.ne.s32.totalorder %s232, %s233
    %p244 = scmp.eq.s32.totalorder %s21, 0
    %p245 = por %p243, %p244
    %p246 = scmp.ne.s32.totalorder %s232, %s233
    %p247 = scmp.eq.s32.totalorder %s22, 1
    %p248 = por %p246, %p247
    %p250 = scmp.ne.s32.totalorder %s233, %s249
    %p251 = scmp.eq.s32.totalorder %s22, 0
    %p252 = por %p250, %p251
    %s253 = ssub.s32 %s16, %s23
    %p254 = scmp.eq.s32.totalorder %s253, 0
    %s256 = sadd.s32 %s255, 1
    %s257 = scalar_select %p254, %s255, %s256
    %p260 = pneg %p254
    %p261 = scmp.eq.s32.totalorder %s16, 1
    %p262 = por %p260, %p261
    %p263 = scmp.ne.s32.totalorder %s255, %s258
    %p264 = scmp.eq.s32.totalorder %s16, 0
    %p265 = por %p263, %p264
    %p266 = scmp.ne.s32.totalorder %s255, %s258
    %p267 = scmp.eq.s32.totalorder %s21, 1
    %p268 = por %p266, %p267
    %p269 = scmp.ne.s32.totalorder %s258, %s259
    %p270 = scmp.eq.s32.totalorder %s21, 0
    %p271 = por %p269, %p270
    %p272 = scmp.ne.s32.totalorder %s258, %s259
    %p273 = scmp.eq.s32.totalorder %s22, 1
    %p274 = por %p272, %p273
    %p276 = scmp.ne.s32.totalorder %s259, %s275
    %p277 = scmp.eq.s32.totalorder %s22, 0
    %p278 = por %p276, %p277
    %p279 = scmp.le.s32.totalorder 1, %s16
    %p280 = scmp.lt.s32.totalorder %s16, 3
    %p281 = pnand %p279, %p280
    %p282 = pneg %p281
    // Predicated region
    $region9: #{sfocus_forward.1} parent=5 // pred_check
      _
    $region10: #{sfocus_forward.1} parent=5 // pred_check_branch
      %284 = sbr.rel (%p281) target = $region12
    $region11: #{sfocus_forward.1} parent=5 // pred_region
      %s285 = ssub.s32 %s16, 1
      // Predicated region
      $region13: #{sfocus_forward.1} parent=11 // pred_check
        %p286 = pneg %p37
      $region14: #{sfocus_forward.1} parent=11 // pred_check_branch
        %288 = sbr.rel (%p286) target = $region16
      $region15: #{sfocus_forward.1} parent=11 // pred_region
        _
      $region16: #{sfocus_forward.1} parent=11 // pred_fallthru
        _
    $region12: #{sfocus_forward.1} parent=5 // pred_fallthru
      _
    %p289 = scmp.lt.s32.totalorder %s16, 2
    // Predicated region
    $region17: #{sfocus_forward.1} parent=5 // pred_check
      %p290 = pneg %p289
    $region18: #{sfocus_forward.1} parent=5 // pred_check_branch
      %292 = sbr.rel (%p290) target = $region20
    $region19: #{sfocus_forward.1} parent=5 // pred_region
      // Predicated region
      $region21: #{sfocus_forward.1} parent=19 // pred_check
        %p293 = pneg %p57
      $region22: #{sfocus_forward.1} parent=19 // pred_check_branch
        %295 = sbr.rel (%p293) target = $region24
      $region23: #{sfocus_forward.1} parent=19 // pred_region
        %p296 = scmp.lt.s32.totalorder %s16, 1
        %s297 = scalar_select %p296, %s16, 1
        %s298 = smul.addr %s297, 8
        %s299 = smul.addr %s298, 8
        %s300 = scalar_lea.vmem %s1, %s299
      $region24: #{sfocus_forward.1} parent=19 // pred_fallthru
        _
      // Predicated region
      $region25: #{sfocus_forward.1} parent=19 // pred_check
        %p301 = pneg %p83
      $region26: #{sfocus_forward.1} parent=19 // pred_check_branch
        %303 = sbr.rel (%p301) target = $region28
      $region27: #{sfocus_forward.1} parent=19 // pred_region
        %p304 = scmp.lt.s32.totalorder %s16, 1
        %s305 = scalar_select %p304, %s16, 1
        %s306 = smul.addr %s305, 4
        %s307 = smul.addr %s306, 8
        %s308 = scalar_lea.vmem %s2, %s307
      $region28: #{sfocus_forward.1} parent=19 // pred_fallthru
        _
      // Predicated region
      $region29: #{sfocus_forward.1} parent=19 // pred_check
        %p309 = pneg %p109
      $region30: #{sfocus_forward.1} parent=19 // pred_check_branch
        %311 = sbr.rel (%p309) target = $region32
      $region31: #{sfocus_forward.1} parent=19 // pred_region
        %p312 = scmp.lt.s32.totalorder %s16, 1
        %s313 = scalar_select %p312, %s16, 1
        %s314 = smul.addr %s313, 4
        %s315 = smul.addr %s314, 8
        %s316 = scalar_lea.vmem %s3, %s315
      $region32: #{sfocus_forward.1} parent=19 // pred_fallthru
        _
      // Predicated region
      $region33: #{sfocus_forward.1} parent=19 // pred_check
        %p317 = pneg %p135
      $region34: #{sfocus_forward.1} parent=19 // pred_check_branch
        %319 = sbr.rel (%p317) target = $region36
      $region35: #{sfocus_forward.1} parent=19 // pred_region
        %p320 = scmp.lt.s32.totalorder %s16, 1
        %s321 = scalar_select %p320, %s16, 1
        %s322 = smul.addr %s321, 4
        %s323 = smul.addr %s322, 8
        %s324 = scalar_lea.vmem %s4, %s323
      $region36: #{sfocus_forward.1} parent=19 // pred_fallthru
        _
      // Predicated region
      $region37: #{sfocus_forward.1} parent=19 // pred_check
        %p325 = pneg %p161
      $region38: #{sfocus_forward.1} parent=19 // pred_check_branch
        %327 = sbr.rel (%p325) target = $region40
      $region39: #{sfocus_forward.1} parent=19 // pred_region
        %p328 = scmp.lt.s32.totalorder %s16, 1
        %s329 = scalar_select %p328, %s16, 1
        %s330 = smul.addr %s329, 8
        %s331 = smul.addr %s330, 8
        %s332 = scalar_lea.vmem %s5, %s331
      $region40: #{sfocus_forward.1} parent=19 // pred_fallthru
        _
      // Predicated region
      $region41: #{sfocus_forward.1} parent=19 // pred_check
        %p333 = pneg %p187
      $region42: #{sfocus_forward.1} parent=19 // pred_check_branch
        %335 = sbr.rel (%p333) target = $region44
      $region43: #{sfocus_forward.1} parent=19 // pred_region
        %p336 = scmp.lt.s32.totalorder %s16, 1
        %s337 = scalar_select %p336, %s16, 1
        %s338 = smul.addr %s337, 4
        %s339 = smul.addr %s338, 8
        %s340 = scalar_lea.vmem %s6, %s339
      $region44: #{sfocus_forward.1} parent=19 // pred_fallthru
        _
      // Predicated region
      $region45: #{sfocus_forward.1} parent=19 // pred_check
        %p341 = pneg %p213
      $region46: #{sfocus_forward.1} parent=19 // pred_check_branch
        %343 = sbr.rel (%p341) target = $region48
      $region47: #{sfocus_forward.1} parent=19 // pred_region
        %p344 = scmp.lt.s32.totalorder %s16, 1
        %s345 = scalar_select %p344, %s16, 1
        %s346 = smul.addr %s345, 4
        %s347 = smul.addr %s346, 8
        %s348 = scalar_lea.vmem %s7, %s347
      $region48: #{sfocus_forward.1} parent=19 // pred_fallthru
        _
      // Predicated region
      $region49: #{sfocus_forward.1} parent=19 // pred_check
        %p349 = pneg %p239
      $region50: #{sfocus_forward.1} parent=19 // pred_check_branch
        %351 = sbr.rel (%p349) target = $region52
      $region51: #{sfocus_forward.1} parent=19 // pred_region
        %p352 = scmp.lt.s32.totalorder %s16, 1
        %s353 = scalar_select %p352, %s16, 1
        %s354 = smul.addr %s353, 4
        %s355 = smul.addr %s354, 8
        %s356 = scalar_lea.vmem %s8, %s355
      $region52: #{sfocus_forward.1} parent=19 // pred_fallthru
        _
    $region20: #{sfocus_forward.1} parent=5 // pred_fallthru
      _
    %p357 = scmp.le.s32.totalorder 1, %s16
    %p358 = scmp.lt.s32.totalorder %s16, 3
    %p359 = pnand %p357, %p358
    %p360 = pneg %p359
    // Predicated region
    $region53: #{sfocus_forward.1} parent=5 // pred_check
      _
    $region54: #{sfocus_forward.1} parent=5 // pred_check_branch
      %362 = sbr.rel (%p359) target = $region56
    $region55: #{sfocus_forward.1} parent=5 // pred_region
      %s363 = ssub.s32 %s16, 1
      %p364 = pneg %p37
      %p365 = pneg %p34
      %p366 = scmp.lt.s32.totalorder %s21, 1
      %s367 = scalar_select %p366, %s21, 1
      %s368 = smul.addr %s367, 8
      %s369 = smul.addr %s368, 8
      %s370 = scalar_lea.vmem %s1, %s369
      %p371 = pneg %p63
      %p372 = pneg %p60
      %p373 = scmp.lt.s32.totalorder %s21, 1
      %s374 = scalar_select %p373, %s21, 1
      %s375 = smul.addr %s374, 4
      %s376 = smul.addr %s375, 8
      %s377 = scalar_lea.vmem %s2, %s376
      %p378 = pneg %p89
      %p379 = pneg %p86
      %p380 = scmp.lt.s32.totalorder %s21, 1
      %s381 = scalar_select %p380, %s21, 1
      %s382 = smul.addr %s381, 4
      %s383 = smul.addr %s382, 8
      %s384 = scalar_lea.vmem %s3, %s383
      %p385 = pneg %p115
      %p386 = pneg %p112
      %p387 = scmp.lt.s32.totalorder %s21, 1
      %s388 = scalar_select %p387, %s21, 1
      %s389 = smul.addr %s388, 4
      %s390 = smul.addr %s389, 8
      %s391 = scalar_lea.vmem %s4, %s390
      %p392 = pneg %p141
      %p393 = pneg %p138
      %p394 = scmp.lt.s32.totalorder %s21, 1
      %s395 = scalar_select %p394, %s21, 1
      %s396 = smul.addr %s395, 8
      %s397 = smul.addr %s396, 8
      %s398 = scalar_lea.vmem %s5, %s397
      %p399 = pneg %p167
      %p400 = pneg %p164
      %p401 = scmp.lt.s32.totalorder %s21, 1
      %s402 = scalar_select %p401, %s21, 1
      %s403 = smul.addr %s402, 4
      %s404 = smul.addr %s403, 8
      %s405 = scalar_lea.vmem %s6, %s404
      %p406 = pneg %p193
      %p407 = pneg %p190
      %p408 = scmp.lt.s32.totalorder %s21, 1
      %s409 = scalar_select %p408, %s21, 1
      %s410 = smul.addr %s409, 4
      %s411 = smul.addr %s410, 8
      %s412 = scalar_lea.vmem %s7, %s411
      %p413 = pneg %p219
      %p414 = pneg %p216
      %p415 = scmp.lt.s32.totalorder %s21, 1
      %s416 = scalar_select %p415, %s21, 1
      %s417 = smul.addr %s416, 4
      %s418 = smul.addr %s417, 8
      %s419 = scalar_lea.vmem %s8, %s418
      %p420 = pneg %p245
      %p421 = pneg %p242
      %p422 = pneg %p271
      %p423 = pneg %p268
      %p424 = scmp.lt.s32.totalorder %s21, 1
      %s425 = scalar_select %p424, %s21, 1
      %s426 = smul.addr %s425, 8
      %s427 = smul.addr %s426, 4
      %s428 = scalar_lea.vmem %s9, %s427
      %p429 = scmp.lt.s32.totalorder %s21, 1
      %s430 = scalar_select %p429, %s21, 1
      %s431 = smul.addr %s430, 8
      %s432 = smul.addr %s431, 8
      %s433 = scalar_lea.vmem %s1, %s432
      %p434 = scmp.lt.s32.totalorder %s21, 1
      %s435 = scalar_select %p434, %s21, 1
      %s436 = smul.addr %s435, 4
      %s437 = smul.addr %s436, 8
      %s438 = scalar_lea.vmem %s2, %s437
      %p439 = scmp.lt.s32.totalorder %s21, 1
      %s440 = scalar_select %p439, %s21, 1
      %s441 = smul.addr %s440, 4
      %s442 = smul.addr %s441, 8
      %s443 = scalar_lea.vmem %s3, %s442
      %p444 = scmp.lt.s32.totalorder %s21, 1
      %s445 = scalar_select %p444, %s21, 1
      %s446 = smul.addr %s445, 4
      %s447 = smul.addr %s446, 8
      %s448 = scalar_lea.vmem %s4, %s447
      %p449 = scmp.lt.s32.totalorder %s21, 1
      %s450 = scalar_select %p449, %s21, 1
      %s451 = smul.addr %s450, 8
      %s452 = smul.addr %s451, 8
      %s453 = scalar_lea.vmem %s5, %s452
      %p454 = scmp.lt.s32.totalorder %s21, 1
      %s455 = scalar_select %p454, %s21, 1
      %s456 = smul.addr %s455, 4
      %s457 = smul.addr %s456, 8
      %s458 = scalar_lea.vmem %s6, %s457
      %p459 = scmp.lt.s32.totalorder %s21, 1
      %s460 = scalar_select %p459, %s21, 1
      %s461 = smul.addr %s460, 4
      %s462 = smul.addr %s461, 8
      %s463 = scalar_lea.vmem %s7, %s462
      %p464 = scmp.lt.s32.totalorder %s21, 1
      %s465 = scalar_select %p464, %s21, 1
      %s466 = smul.addr %s465, 4
      %s467 = smul.addr %s466, 8
      %s468 = scalar_lea.vmem %s8, %s467
      %p469 = scmp.lt.s32.totalorder %s21, 1
      %s470 = scalar_select %p469, %s21, 1
      %s471 = smul.addr %s470, 8
      %s472 = smul.addr %s471, 4
      %s473 = scalar_lea.vmem %s9, %s472
      %s474 = sld [smem:[#allocation2]]
      %475 = vst [vmem:[%s473] sm:$0xff] 0.0
      %476 = vst [vmem:[%s473 + $0x8] sm:$0xff] 0.0
      %477 = vst [vmem:[%s473 + $0x10] sm:$0xff] 0.0
      %478 = vst [vmem:[%s473 + $0x18] sm:$0xff] 0.0
      %v479 = vld [vmem:[%s433] sm:$0xff]
      %v480 = vld [vmem:[%s433 + $0x8] sm:$0xff]
      %v481 = vld [vmem:[%s433 + $0x10] sm:$0xff]
      %v482 = vld [vmem:[%s433 + $0x18] sm:$0xff]
      %v483 = vld [vmem:[%s433 + $0x20] sm:$0xff]
      %v484 = vld [vmem:[%s433 + $0x28] sm:$0xff]
      %v485 = vld [vmem:[%s433 + $0x30] sm:$0xff]
      %v486 = vld [vmem:[%s433 + $0x38] sm:$0xff]
      %v487 = vld [vmem:[%s453] sm:$0xff]
      %v488 = vld [vmem:[%s453 + $0x8] sm:$0xff]
      %v489 = vld [vmem:[%s453 + $0x10] sm:$0xff]
      %v490 = vld [vmem:[%s453 + $0x18] sm:$0xff]
      %v491 = vld [vmem:[%s453 + $0x20] sm:$0xff]
      %v492 = vld [vmem:[%s453 + $0x28] sm:$0xff]
      %v493 = vld [vmem:[%s453 + $0x30] sm:$0xff]
      %v494 = vld [vmem:[%s453 + $0x38] sm:$0xff]
      %v495 = vstv %s474
      %v496 = vmul.f32 %v487, %v495
      %v497 = vmul.f32 %v488, %v495
      %v498 = vmul.f32 %v489, %v495
      %v499 = vmul.f32 %v490, %v495
      %v500 = vmul.f32 %v491, %v495
      %v501 = vmul.f32 %v492, %v495
      %v502 = vmul.f32 %v493, %v495
      %v503 = vmul.f32 %v494, %v495
      %v504 = vmax.f32 %v496, 0.0
      %v505 = vmax.f32 %v497, 0.0
      %v506 = vmax.f32 %v498, 0.0
      %v507 = vmax.f32 %v499, 0.0
      %v508 = vmax.f32 %v500, 0.0
      %v509 = vmax.f32 %v501, 0.0
      %v510 = vmax.f32 %v502, 0.0
      %v511 = vmax.f32 %v503, 0.0
      %512 = vmatpush.xpose.msra.mxu0 0.0
      %513 = vmatpush.xpose.msra.mxu0 0.0
      %514 = vmatpush.xpose.msra.mxu0 0.0
      %515 = vmatpush.xpose.msra.mxu0 0.0
      %516 = vmatpush.xpose.msra.mxu0 0.0
      %517 = vmatpush.xpose.msra.mxu0 0.0
      %518 = vmatpush.xpose.msra.mxu0 0.0
      %519 = vmatpush.xpose.msra.mxu0 0.0
      %520 = vmatpush.xpose.msra.mxu0 0.0
      %521 = vmatpush.xpose.msra.mxu0 0.0
      %522 = vmatpush.xpose.msra.mxu0 0.0
      %523 = vmatpush.xpose.msra.mxu0 0.0
      %524 = vmatpush.xpose.msra.mxu0 0.0
      %525 = vmatpush.xpose.msra.mxu0 0.0
      %526 = vmatpush.xpose.msra.mxu0 0.0
      %527 = vmatpush.xpose.msra.mxu0 %v504
      %528 = vmatmul.f32.gmra.mxu0 0.0009765625
      %v529 = vpop.f32.mrf.mxu0
      %v530 = vadd.f32 0.0, %v529
      %531 = vdwg.mxu0
      %532 = vmatpush.xpose.msra.mxu0 0.0
      %533 = vmatpush.xpose.msra.mxu0 0.0
      %534 = vmatpush.xpose.msra.mxu0 0.0
      %535 = vmatpush.xpose.msra.mxu0 0.0
      %536 = vmatpush.xpose.msra.mxu0 0.0
      %537 = vmatpush.xpose.msra.mxu0 0.0
      %538 = vmatpush.xpose.msra.mxu0 0.0
      %539 = vmatpush.xpose.msra.mxu0 0.0
      %540 = vmatpush.xpose.msra.mxu0 0.0
      %541 = vmatpush.xpose.msra.mxu0 0.0
      %542 = vmatpush.xpose.msra.mxu0 0.0
      %543 = vmatpush.xpose.msra.mxu0 0.0
      %544 = vmatpush.xpose.msra.mxu0 0.0
      %545 = vmatpush.xpose.msra.mxu0 0.0
      %546 = vmatpush.xpose.msra.mxu0 0.0
      %547 = vmatpush.xpose.msra.mxu0 %v505
      %548 = vmatmul.f32.gmra.mxu0 0.0009765625
      %v549 = vpop.f32.mrf.mxu0
      %v550 = vadd.f32 %v530, %v549
      %551 = vdwg.mxu0
      %552 = vmatpush.xpose.msra.mxu0 0.0
      %553 = vmatpush.xpose.msra.mxu0 0.0
      %554 = vmatpush.xpose.msra.mxu0 0.0
      %555 = vmatpush.xpose.msra.mxu0 0.0
      %556 = vmatpush.xpose.msra.mxu0 0.0
      %557 = vmatpush.xpose.msra.mxu0 0.0
      %558 = vmatpush.xpose.msra.mxu0 0.0
      %559 = vmatpush.xpose.msra.mxu0 0.0
      %560 = vmatpush.xpose.msra.mxu0 0.0
      %561 = vmatpush.xpose.msra.mxu0 0.0
      %562 = vmatpush.xpose.msra.mxu0 0.0
      %563 = vmatpush.xpose.msra.mxu0 0.0
      %564 = vmatpush.xpose.msra.mxu0 0.0
      %565 = vmatpush.xpose.msra.mxu0 0.0
      %566 = vmatpush.xpose.msra.mxu0 0.0
      %567 = vmatpush.xpose.msra.mxu0 %v506
      %568 = vmatmul.f32.gmra.mxu0 0.0009765625
      %v569 = vpop.f32.mrf.mxu0
      %v570 = vadd.f32 %v550, %v569
      %571 = vdwg.mxu0
      %572 = vmatpush.xpose.msra.mxu0 0.0
      %573 = vmatpush.xpose.msra.mxu0 0.0
      %574 = vmatpush.xpose.msra.mxu0 0.0
      %575 = vmatpush.xpose.msra.mxu0 0.0
      %576 = vmatpush.xpose.msra.mxu0 0.0
      %577 = vmatpush.xpose.msra.mxu0 0.0
      %578 = vmatpush.xpose.msra.mxu0 0.0
      %579 = vmatpush.xpose.msra.mxu0 0.0
      %580 = vmatpush.xpose.msra.mxu0 0.0
      %581 = vmatpush.xpose.msra.mxu0 0.0
      %582 = vmatpush.xpose.msra.mxu0 0.0
      %583 = vmatpush.xpose.msra.mxu0 0.0
      %584 = vmatpush.xpose.msra.mxu0 0.0
      %585 = vmatpush.xpose.msra.mxu0 0.0
      %586 = vmatpush.xpose.msra.mxu0 0.0
      %587 = vmatpush.xpose.msra.mxu0 %v507
      %588 = vmatmul.f32.gmra.mxu0 0.0009765625
      %v589 = vpop.f32.mrf.mxu0
      %v590 = vadd.f32 %v570, %v589
      %591 = vdwg.mxu0
      %592 = vmatpush.xpose.msra.mxu0 0.0
      %593 = vmatpush.xpose.msra.mxu0 0.0
      %594 = vmatpush.xpose.msra.mxu0 0.0
      %595 = vmatpush.xpose.msra.mxu0 0.0
      %596 = vmatpush.xpose.msra.mxu0 0.0
      %597 = vmatpush.xpose.msra.mxu0 0.0
      %598 = vmatpush.xpose.msra.mxu0 0.0
      %599 = vmatpush.xpose.msra.mxu0 0.0
      %600 = vmatpush.xpose.msra.mxu0 0.0
      %601 = vmatpush.xpose.msra.mxu0 0.0
      %602 = vmatpush.xpose.msra.mxu0 0.0
      %603 = vmatpush.xpose.msra.mxu0 0.0
      %604 = vmatpush.xpose.msra.mxu0 0.0
      %605 = vmatpush.xpose.msra.mxu0 0.0
      %606 = vmatpush.xpose.msra.mxu0 0.0
      %607 = vmatpush.xpose.msra.mxu0 %v508
      %608 = vmatmul.f32.gmra.mxu0 0.0009765625
      %v609 = vpop.f32.mrf.mxu0
      %v610 = vadd.f32 %v590, %v609
      %611 = vdwg.mxu0
      %612 = vmatpush.xpose.msra.mxu0 0.0
      %613 = vmatpush.xpose.msra.mxu0 0.0
      %614 = vmatpush.xpose.msra.mxu0 0.0
      %615 = vmatpush.xpose.msra.mxu0 0.0
      %616 = vmatpush.xpose.msra.mxu0 0.0
      %617 = vmatpush.xpose.msra.mxu0 0.0
      %618 = vmatpush.xpose.msra.mxu0 0.0
      %619 = vmatpush.xpose.msra.mxu0 0.0
      %620 = vmatpush.xpose.msra.mxu0 0.0
      %621 = vmatpush.xpose.msra.mxu0 0.0
      %622 = vmatpush.xpose.msra.mxu0 0.0
      %623 = vmatpush.xpose.msra.mxu0 0.0
      %624 = vmatpush.xpose.msra.mxu0 0.0
      %625 = vmatpush.xpose.msra.mxu0 0.0
      %626 = vmatpush.xpose.msra.mxu0 0.0
      %627 = vmatpush.xpose.msra.mxu0 %v509
      %628 = vmatmul.f32.gmra.mxu0 0.0009765625
      %v629 = vpop.f32.mrf.mxu0
      %v630 = vadd.f32 %v610, %v629
      %631 = vdwg.mxu0
      %632 = vmatpush.xpose.msra.mxu0 0.0
      %633 = vmatpush.xpose.msra.mxu0 0.0
      %634 = vmatpush.xpose.msra.mxu0 0.0
      %635 = vmatpush.xpose.msra.mxu0 0.0
      %636 = vmatpush.xpose.msra.mxu0 0.0
      %637 = vmatpush.xpose.msra.mxu0 0.0
      %638 = vmatpush.xpose.msra.mxu0 0.0
      %639 = vmatpush.xpose.msra.mxu0 0.0
      %640 = vmatpush.xpose.msra.mxu0 0.0
      %641 = vmatpush.xpose.msra.mxu0 0.0
      %642 = vmatpush.xpose.msra.mxu0 0.0
      %643 = vmatpush.xpose.msra.mxu0 0.0
      %644 = vmatpush.xpose.msra.mxu0 0.0
      %645 = vmatpush.xpose.msra.mxu0 0.0
      %646 = vmatpush.xpose.msra.mxu0 0.0
      %647 = vmatpush.xpose.msra.mxu0 %v510
      %648 = vmatmul.f32.gmra.mxu0 0.0009765625
      %v649 = vpop.f32.mrf.mxu0
      %v650 = vadd.f32 %v630, %v649
      %651 = vdwg.mxu0
      %652 = vmatpush.xpose.msra.mxu0 0.0
      %653 = vmatpush.xpose.msra.mxu0 0.0
      %654 = vmatpush.xpose.msra.mxu0 0.0
      %655 = vmatpush.xpose.msra.mxu0 0.0
      %656 = vmatpush.xpose.msra.mxu0 0.0
      %657 = vmatpush.xpose.msra.mxu0 0.0
      %658 = vmatpush.xpose.msra.mxu0 0.0
      %659 = vmatpush.xpose.msra.mxu0 0.0
      %660 = vmatpush.xpose.msra.mxu0 0.0
      %661 = vmatpush.xpose.msra.mxu0 0.0
      %662 = vmatpush.xpose.msra.mxu0 0.0
      %663 = vmatpush.xpose.msra.mxu0 0.0
      %664 = vmatpush.xpose.msra.mxu0 0.0
      %665 = vmatpush.xpose.msra.mxu0 0.0
      %666 = vmatpush.xpose.msra.mxu0 0.0
      %667 = vmatpush.xpose.msra.mxu0 %v511
      %668 = vmatmul.f32.gmra.mxu0 0.0009765625
      %v669 = vpop.f32.mrf.mxu0
      %v670 = vadd.f32 %v650, %v669
      %671 = vdwg.mxu0
      %vm672 = vcmask 64512
      %v674 = vsel %vm672, %v670, 0
      %676 = vmatpush.msra.mxu0 0.0
      %677 = vmatpush.msra.mxu0 0.0
      %678 = vmatpush.msra.mxu0 0.0
      %679 = vmatpush.msra.mxu0 0.0
      %680 = vmatpush.msra.mxu0 0.0
      %681 = vmatpush.msra.mxu0 0.0
      %682 = vmatpush.msra.mxu0 0.0
      %683 = vmatpush.msra.mxu0 0.0
      %684 = vmatpush.msra.mxu0 0.0
      %685 = vmatpush.msra.mxu0 0.0
      %686 = vmatpush.msra.mxu0 0.0
      %687 = vmatpush.msra.mxu0 0.0
      %688 = vmatpush.msra.mxu0 0.0
      %689 = vmatpush.msra.mxu0 0.0
      %690 = vmatpush.msra.mxu0 0.0
      %691 = vmatpush.msra.mxu0 %v479
      %692 = vmatmul.f32.gmra.mxu0 %v674
      %v693 = vpop.f32.mrf.mxu0
      %v694 = vadd.f32 0.0, %v693
      %695 = vdwg.mxu0
      %696 = vmatpush.msra.mxu0 0.0
      %697 = vmatpush.msra.mxu0 0.0
      %698 = vmatpush.msra.mxu0 0.0
      %699 = vmatpush.msra.mxu0 0.0
      %700 = vmatpush.msra.mxu0 0.0
      %701 = vmatpush.msra.mxu0 0.0
      %702 = vmatpush.msra.mxu0 0.0
      %703 = vmatpush.msra.mxu0 0.0
      %704 = vmatpush.msra.mxu0 0.0
      %705 = vmatpush.msra.mxu0 0.0
      %706 = vmatpush.msra.mxu0 0.0
      %707 = vmatpush.msra.mxu0 0.0
      %708 = vmatpush.msra.mxu0 0.0
      %709 = vmatpush.msra.mxu0 0.0
      %710 = vmatpush.msra.mxu0 0.0
      %711 = vmatpush.msra.mxu0 %v480
      %712 = vmatmul.f32.gmra.mxu0 %v674
      %v713 = vpop.f32.mrf.mxu0
      %v714 = vadd.f32 0.0, %v713
      %715 = vdwg.mxu0
      %716 = vmatpush.msra.mxu0 0.0
      %717 = vmatpush.msra.mxu0 0.0
      %718 = vmatpush.msra.mxu0 0.0
      %719 = vmatpush.msra.mxu0 0.0
      %720 = vmatpush.msra.mxu0 0.0
      %721 = vmatpush.msra.mxu0 0.0
      %722 = vmatpush.msra.mxu0 0.0
      %723 = vmatpush.msra.mxu0 0.0
      %724 = vmatpush.msra.mxu0 0.0
      %725 = vmatpush.msra.mxu0 0.0
      %726 = vmatpush.msra.mxu0 0.0
      %727 = vmatpush.msra.mxu0 0.0
      %728 = vmatpush.msra.mxu0 0.0
      %729 = vmatpush.msra.mxu0 0.0
      %730 = vmatpush.msra.mxu0 0.0
      %731 = vmatpush.msra.mxu0 %v481
      %732 = vmatmul.f32.gmra.mxu0 %v674
      %v733 = vpop.f32.mrf.mxu0
      %v734 = vadd.f32 0.0, %v733
      %735 = vdwg.mxu0
      %736 = vmatpush.msra.mxu0 0.0
      %737 = vmatpush.msra.mxu0 0.0
      %738 = vmatpush.msra.mxu0 0.0
      %739 = vmatpush.msra.mxu0 0.0
      %740 = vmatpush.msra.mxu0 0.0
      %741 = vmatpush.msra.mxu0 0.0
      %742 = vmatpush.msra.mxu0 0.0
      %743 = vmatpush.msra.mxu0 0.0
      %744 = vmatpush.msra.mxu0 0.0
      %745 = vmatpush.msra.mxu0 0.0
      %746 = vmatpush.msra.mxu0 0.0
      %747 = vmatpush.msra.mxu0 0.0
      %748 = vmatpush.msra.mxu0 0.0
      %749 = vmatpush.msra.mxu0 0.0
      %750 = vmatpush.msra.mxu0 0.0
      %751 = vmatpush.msra.mxu0 %v482
      %752 = vmatmul.f32.gmra.mxu0 %v674
      %v753 = vpop.f32.mrf.mxu0
      %v754 = vadd.f32 0.0, %v753
      %755 = vdwg.mxu0
      %756 = vmatpush.msra.mxu0 0.0
      %757 = vmatpush.msra.mxu0 0.0
      %758 = vmatpush.msra.mxu0 0.0
      %759 = vmatpush.msra.mxu0 0.0
      %760 = vmatpush.msra.mxu0 0.0
      %761 = vmatpush.msra.mxu0 0.0
      %762 = vmatpush.msra.mxu0 0.0
      %763 = vmatpush.msra.mxu0 0.0
      %764 = vmatpush.msra.mxu0 0.0
      %765 = vmatpush.msra.mxu0 0.0
      %766 = vmatpush.msra.mxu0 0.0
      %767 = vmatpush.msra.mxu0 0.0
      %768 = vmatpush.msra.mxu0 0.0
      %769 = vmatpush.msra.mxu0 0.0
      %770 = vmatpush.msra.mxu0 0.0
      %771 = vmatpush.msra.mxu0 %v483
      %772 = vmatmul.f32.gmra.mxu0 %v674
      %v773 = vpop.f32.mrf.mxu0
      %v774 = vadd.f32 0.0, %v773
      %775 = vdwg.mxu0
      %776 = vmatpush.msra.mxu0 0.0
      %777 = vmatpush.msra.mxu0 0.0
      %778 = vmatpush.msra.mxu0 0.0
      %779 = vmatpush.msra.mxu0 0.0
      %780 = vmatpush.msra.mxu0 0.0
      %781 = vmatpush.msra.mxu0 0.0
      %782 = vmatpush.msra.mxu0 0.0
      %783 = vmatpush.msra.mxu0 0.0
      %784 = vmatpush.msra.mxu0 0.0
      %785 = vmatpush.msra.mxu0 0.0
      %786 = vmatpush.msra.mxu0 0.0
      %787 = vmatpush.msra.mxu0 0.0
      %788 = vmatpush.msra.mxu0 0.0
      %789 = vmatpush.msra.mxu0 0.0
      %790 = vmatpush.msra.mxu0 0.0
      %791 = vmatpush.msra.mxu0 %v484
      %792 = vmatmul.f32.gmra.mxu0 %v674
      %v793 = vpop.f32.mrf.mxu0
      %v794 = vadd.f32 0.0, %v793
      %795 = vdwg.mxu0
      %796 = vmatpush.msra.mxu0 0.0
      %797 = vmatpush.msra.mxu0 0.0
      %798 = vmatpush.msra.mxu0 0.0
      %799 = vmatpush.msra.mxu0 0.0
      %800 = vmatpush.msra.mxu0 0.0
      %801 = vmatpush.msra.mxu0 0.0
      %802 = vmatpush.msra.mxu0 0.0
      %803 = vmatpush.msra.mxu0 0.0
      %804 = vmatpush.msra.mxu0 0.0
      %805 = vmatpush.msra.mxu0 0.0
      %806 = vmatpush.msra.mxu0 0.0
      %807 = vmatpush.msra.mxu0 0.0
      %808 = vmatpush.msra.mxu0 0.0
      %809 = vmatpush.msra.mxu0 0.0
      %810 = vmatpush.msra.mxu0 0.0
      %811 = vmatpush.msra.mxu0 %v485
      %812 = vmatmul.f32.gmra.mxu0 %v674
      %v813 = vpop.f32.mrf.mxu0
      %v814 = vadd.f32 0.0, %v813
      %815 = vdwg.mxu0
      %816 = vmatpush.msra.mxu0 0.0
      %817 = vmatpush.msra.mxu0 0.0
      %818 = vmatpush.msra.mxu0 0.0
      %819 = vmatpush.msra.mxu0 0.0
      %820 = vmatpush.msra.mxu0 0.0
      %821 = vmatpush.msra.mxu0 0.0
      %822 = vmatpush.msra.mxu0 0.0
      %823 = vmatpush.msra.mxu0 0.0
      %824 = vmatpush.msra.mxu0 0.0
      %825 = vmatpush.msra.mxu0 0.0
      %826 = vmatpush.msra.mxu0 0.0
      %827 = vmatpush.msra.mxu0 0.0
      %828 = vmatpush.msra.mxu0 0.0
      %829 = vmatpush.msra.mxu0 0.0
      %830 = vmatpush.msra.mxu0 0.0
      %831 = vmatpush.msra.mxu0 %v486
      %832 = vmatmul.f32.gmra.mxu0 %v674
      %v833 = vpop.f32.mrf.mxu0
      %v834 = vadd.f32 0.0, %v833
      %835 = vdwg.mxu0
      %v836 = vmax.f32 %v694, 0.0
      %v837 = vmax.f32 %v714, 0.0
      %v838 = vmax.f32 %v734, 0.0
      %v839 = vmax.f32 %v754, 0.0
      %v840 = vmax.f32 %v774, 0.0
      %v841 = vmax.f32 %v794, 0.0
      %v842 = vmax.f32 %v814, 0.0
      %v843 = vmax.f32 %v834, 0.0
      %v852 = vrot.slane %v837, 7
      %v853 = vrot.slane %v838, 6
      %v854 = vrot.slane %v839, 5
      %v855 = vrot.slane %v840, 4
      %v856 = vrot.slane %v841, 3
      %v857 = vrot.slane %v842, 2
      %v858 = vrot.slane %v843, 1
      %vm859 = vcmask 1040384
      %v860 = vsel %vm859, %v836, %v852
      %vm861 = vcmask 1042434
      %v862 = vsel %vm861, %v853, %v854
      %vm863 = vcmask 1041408
      %v864 = vsel %vm863, %v860, %v862
      %vm865 = vcmask 1044484
      %v866 = vsel %vm865, %v855, %v856
      %vm867 = vcmask 1046534
      %v868 = vsel %vm867, %v857, %v858
      %vm869 = vcmask 1045508
      %v870 = vsel %vm869, %v866, %v868
      %vm871 = vcmask 1043456
      %v872 = vsel %vm871, %v864, %v870
      %874 = vst [vmem:[%s473] ss:$4 sm:$0xff] %v872
      %v875 = vld [vmem:[%s438] sm:$0xff]
      %v876 = vld [vmem:[%s438 + $0x8] sm:$0xff]
      %v877 = vld [vmem:[%s438 + $0x10] sm:$0xff]
      %v878 = vld [vmem:[%s438 + $0x18] sm:$0xff]
      %v879 = vld [vmem:[%s458] sm:$0xff]
      %v880 = vld [vmem:[%s458 + $0x8] sm:$0xff]
      %v881 = vld [vmem:[%s458 + $0x10] sm:$0xff]
      %v882 = vld [vmem:[%s458 + $0x18] sm:$0xff]
      %v883 = vmul.f32 %v879, %v495
      %v884 = vmul.f32 %v880, %v495
      %v885 = vmul.f32 %v881, %v495
      %v886 = vmul.f32 %v882, %v495
      %v887 = vmax.f32 %v883, 0.0
      %v888 = vmax.f32 %v884, 0.0
      %v889 = vmax.f32 %v885, 0.0
      %v890 = vmax.f32 %v886, 0.0
      %891 = vmatpush.xpose.msra.mxu0 0.0
      %892 = vmatpush.xpose.msra.mxu0 0.0
      %893 = vmatpush.xpose.msra.mxu0 0.0
      %894 = vmatpush.xpose.msra.mxu0 0.0
      %895 = vmatpush.xpose.msra.mxu0 0.0
      %896 = vmatpush.xpose.msra.mxu0 0.0
      %897 = vmatpush.xpose.msra.mxu0 0.0
      %898 = vmatpush.xpose.msra.mxu0 0.0
      %899 = vmatpush.xpose.msra.mxu0 0.0
      %900 = vmatpush.xpose.msra.mxu0 0.0
      %901 = vmatpush.xpose.msra.mxu0 0.0
      %902 = vmatpush.xpose.msra.mxu0 0.0
      %903 = vmatpush.xpose.msra.mxu0 0.0
      %904 = vmatpush.xpose.msra.mxu0 0.0
      %905 = vmatpush.xpose.msra.mxu0 %v889
      %906 = vmatpush.xpose.msra.mxu0 %v887
      %907 = vmatmul.f32.gmra.mxu0 0.00390625
      %v908 = vpop.f32.mrf.mxu0
      %v909 = vadd.f32 0.0, %v908
      %910 = vdwg.mxu0
      %911 = vmatpush.xpose.msra.mxu0 0.0
      %912 = vmatpush.xpose.msra.mxu0 0.0
      %913 = vmatpush.xpose.msra.mxu0 0.0
      %914 = vmatpush.xpose.msra.mxu0 0.0
      %915 = vmatpush.xpose.msra.mxu0 0.0
      %916 = vmatpush.xpose.msra.mxu0 0.0
      %917 = vmatpush.xpose.msra.mxu0 0.0
      %918 = vmatpush.xpose.msra.mxu0 0.0
      %919 = vmatpush.xpose.msra.mxu0 0.0
      %920 = vmatpush.xpose.msra.mxu0 0.0
      %921 = vmatpush.xpose.msra.mxu0 0.0
      %922 = vmatpush.xpose.msra.mxu0 0.0
      %923 = vmatpush.xpose.msra.mxu0 0.0
      %924 = vmatpush.xpose.msra.mxu0 0.0
      %925 = vmatpush.xpose.msra.mxu0 %v890
      %926 = vmatpush.xpose.msra.mxu0 %v888
      %927 = vmatmul.f32.gmra.mxu0 0.00390625
      %v928 = vpop.f32.mrf.mxu0
      %v929 = vadd.f32 %v909, %v928
      %930 = vdwg.mxu0
      %vm931 = vcmask 130048
      %v933 = vsel %vm931, %v929, 0
      %935 = vmatpush.msra.mxu0 0.0
      %936 = vmatpush.msra.mxu0 0.0
      %937 = vmatpush.msra.mxu0 0.0
      %938 = vmatpush.msra.mxu0 0.0
      %939 = vmatpush.msra.mxu0 0.0
      %940 = vmatpush.msra.mxu0 0.0
      %941 = vmatpush.msra.mxu0 0.0
      %942 = vmatpush.msra.mxu0 0.0
      %943 = vmatpush.msra.mxu0 0.0
      %944 = vmatpush.msra.mxu0 0.0
      %945 = vmatpush.msra.mxu0 0.0
      %946 = vmatpush.msra.mxu0 0.0
      %947 = vmatpush.msra.mxu0 0.0
      %948 = vmatpush.msra.mxu0 0.0
      %949 = vmatpush.msra.mxu0 %v877
      %950 = vmatpush.msra.mxu0 %v875
      %951 = vmatmul.f32.gmra.mxu0 %v933
      %v952 = vpop.f32.mrf.mxu0
      %v953 = vadd.f32 0.0, %v952
      %954 = vdwg.mxu0
      %955 = vmatpush.msra.mxu0 0.0
      %956 = vmatpush.msra.mxu0 0.0
      %957 = vmatpush.msra.mxu0 0.0
      %958 = vmatpush.msra.mxu0 0.0
      %959 = vmatpush.msra.mxu0 0.0
      %960 = vmatpush.msra.mxu0 0.0
      %961 = vmatpush.msra.mxu0 0.0
      %962 = vmatpush.msra.mxu0 0.0
      %963 = vmatpush.msra.mxu0 0.0
      %964 = vmatpush.msra.mxu0 0.0
      %965 = vmatpush.msra.mxu0 0.0
      %966 = vmatpush.msra.mxu0 0.0
      %967 = vmatpush.msra.mxu0 0.0
      %968 = vmatpush.msra.mxu0 0.0
      %969 = vmatpush.msra.mxu0 %v878
      %970 = vmatpush.msra.mxu0 %v876
      %971 = vmatmul.f32.gmra.mxu0 %v933
      %v972 = vpop.f32.mrf.mxu0
      %v973 = vadd.f32 0.0, %v972
      %974 = vdwg.mxu0
      %v975 = vmax.f32 %v953, 0.0
      %v976 = vmax.f32 %v973, 0.0
      %v979 = vrot.slane %v976, 7
      %v980 = vsel %vm859, %v975, %v979
      %v982 = vlaneseq
      %vm983 = vcmp.ge.s32.totalorder %v982, 0
      %vm984 = vcmp.lt.s32.totalorder %v982, 256
      %vm985 = vmand %vm983, %vm984
      %s986 = scalar_lea.vmem %s473, 1
      %987 = vst.msk [vmem:[%s986] ss:$4 sm:$0x3] %vm985, %v980
      %v988 = vld [vmem:[%s443] sm:$0xff]
      %v989 = vld [vmem:[%s443 + $0x8] sm:$0xff]
      %v990 = vld [vmem:[%s443 + $0x10] sm:$0xff]
      %v991 = vld [vmem:[%s443 + $0x18] sm:$0xff]
      %v992 = vld [vmem:[%s463] sm:$0xff]
      %v993 = vld [vmem:[%s463 + $0x8] sm:$0xff]
      %v994 = vld [vmem:[%s463 + $0x10] sm:$0xff]
      %v995 = vld [vmem:[%s463 + $0x18] sm:$0xff]
      %v996 = vmul.f32 %v992, %v495
      %v997 = vmul.f32 %v993, %v495
      %v998 = vmul.f32 %v994, %v495
      %v999 = vmul.f32 %v995, %v495
      %v1000 = vmax.f32 %v996, 0.0
      %v1001 = vmax.f32 %v997, 0.0
      %v1002 = vmax.f32 %v998, 0.0
      %v1003 = vmax.f32 %v999, 0.0
      %vm1004 = vcmask 523264
      %v1006 = vsel %vm1004, 0.015625, 0
      %v1009 = vsel %vm1004, %v1000, 0
      %v1012 = vsel %vm1004, %v1001, 0
      %v1015 = vsel %vm1004, %v1002, 0
      %v1018 = vsel %vm1004, %v1003, 0
      %1020 = vmatpush.xpose.msra.mxu0 0.0
      %1021 = vmatpush.xpose.msra.mxu0 0.0
      %1022 = vmatpush.xpose.msra.mxu0 0.0
      %1023 = vmatpush.xpose.msra.mxu0 0.0
      %1024 = vmatpush.xpose.msra.mxu0 0.0
      %1025 = vmatpush.xpose.msra.mxu0 0.0
      %1026 = vmatpush.xpose.msra.mxu0 0.0
      %1027 = vmatpush.xpose.msra.mxu0 0.0
      %1028 = vmatpush.xpose.msra.mxu0 0.0
      %1029 = vmatpush.xpose.msra.mxu0 0.0
      %1030 = vmatpush.xpose.msra.mxu0 0.0
      %1031 = vmatpush.xpose.msra.mxu0 0.0
      %1032 = vmatpush.xpose.msra.mxu0 %v1018
      %1033 = vmatpush.xpose.msra.mxu0 %v1015
      %1034 = vmatpush.xpose.msra.mxu0 %v1012
      %1035 = vmatpush.xpose.msra.mxu0 %v1009
      %1036 = vmatmul.f32.gmra.mxu0 %v1006
      %v1037 = vpop.f32.mrf.mxu0
      %v1038 = vadd.f32 0.0, %v1037
      %1039 = vdwg.mxu0
      %vm1040 = vcmask 261120
      %v1042 = vsel %vm1040, %v1038, 0
      %1044 = vmatpush.msra.mxu0 0.0
      %1045 = vmatpush.msra.mxu0 0.0
      %1046 = vmatpush.msra.mxu0 0.0
      %1047 = vmatpush.msra.mxu0 0.0
      %1048 = vmatpush.msra.mxu0 0.0
      %1049 = vmatpush.msra.mxu0 0.0
      %1050 = vmatpush.msra.mxu0 0.0
      %1051 = vmatpush.msra.mxu0 0.0
      %1052 = vmatpush.msra.mxu0 0.0
      %1053 = vmatpush.msra.mxu0 0.0
      %1054 = vmatpush.msra.mxu0 0.0
      %1055 = vmatpush.msra.mxu0 0.0
      %1056 = vmatpush.msra.mxu0 %v991
      %1057 = vmatpush.msra.mxu0 %v990
      %1058 = vmatpush.msra.mxu0 %v989
      %1059 = vmatpush.msra.mxu0 %v988
      %1060 = vmatmul.f32.gmra.mxu0 %v1042
      %v1061 = vpop.f32.mrf.mxu0
      %v1062 = vadd.f32 0.0, %v1061
      %1063 = vdwg.mxu0
      %v1064 = vmax.f32 %v1062, 0.0
      %vm1065 = vcmask 516096
      %1066 = vst.msk [vmem:[%s473 + $0x2] sm:$0x1] %vm1065, %v1064
      %v1067 = vld [vmem:[%s448] sm:$0xff]
      %v1068 = vld [vmem:[%s448 + $0x8] sm:$0xff]
      %v1069 = vld [vmem:[%s448 + $0x10] sm:$0xff]
      %v1070 = vld [vmem:[%s448 + $0x18] sm:$0xff]
      %v1071 = vld [vmem:[%s468] sm:$0xff]
      %v1072 = vld [vmem:[%s468 + $0x8] sm:$0xff]
      %v1073 = vld [vmem:[%s468 + $0x10] sm:$0xff]
      %v1074 = vld [vmem:[%s468 + $0x18] sm:$0xff]
      %v1075 = vmul.f32 %v1071, %v495
      %v1076 = vmul.f32 %v1072, %v495
      %v1077 = vmul.f32 %v1073, %v495
      %v1078 = vmul.f32 %v1074, %v495
      %v1079 = vmax.f32 %v1075, 0.0
      %v1080 = vmax.f32 %v1076, 0.0
      %v1081 = vmax.f32 %v1077, 0.0
      %v1082 = vmax.f32 %v1078, 0.0
      %v1084 = vsel %vm931, 0.0625, 0
      %v1087 = vsel %vm931, %v1079, 0
      %v1090 = vsel %vm931, %v1080, 0
      %v1093 = vsel %vm931, %v1081, 0
      %v1096 = vsel %vm931, %v1082, 0
      %1098 = vmatpush.xpose.msra.mxu0 0.0
      %1099 = vmatpush.xpose.msra.mxu0 0.0
      %1100 = vmatpush.xpose.msra.mxu0 0.0
      %1101 = vmatpush.xpose.msra.mxu0 0.0
      %1102 = vmatpush.xpose.msra.mxu0 0.0
      %1103 = vmatpush.xpose.msra.mxu0 0.0
      %1104 = vmatpush.xpose.msra.mxu0 0.0
      %1105 = vmatpush.xpose.msra.mxu0 0.0
      %1106 = vmatpush.xpose.msra.mxu0 0.0
      %1107 = vmatpush.xpose.msra.mxu0 0.0
      %1108 = vmatpush.xpose.msra.mxu0 0.0
      %1109 = vmatpush.xpose.msra.mxu0 0.0
      %1110 = vmatpush.xpose.msra.mxu0 %v1096
      %1111 = vmatpush.xpose.msra.mxu0 %v1093
      %1112 = vmatpush.xpose.msra.mxu0 %v1090
      %1113 = vmatpush.xpose.msra.mxu0 %v1087
      %1114 = vmatmul.f32.gmra.mxu0 %v1084
      %v1115 = vpop.f32.mrf.mxu0
      %v1116 = vadd.f32 0.0, %v1115
      %1117 = vdwg.mxu0
      %v1119 = vsel %vm1040, %v1116, 0
      %1121 = vmatpush.msra.mxu0 0.0
      %1122 = vmatpush.msra.mxu0 0.0
      %1123 = vmatpush.msra.mxu0 0.0
      %1124 = vmatpush.msra.mxu0 0.0
      %1125 = vmatpush.msra.mxu0 0.0
      %1126 = vmatpush.msra.mxu0 0.0
      %1127 = vmatpush.msra.mxu0 0.0
      %1128 = vmatpush.msra.mxu0 0.0
      %1129 = vmatpush.msra.mxu0 0.0
      %1130 = vmatpush.msra.mxu0 0.0
      %1131 = vmatpush.msra.mxu0 0.0
      %1132 = vmatpush.msra.mxu0 0.0
      %1133 = vmatpush.msra.mxu0 %v1070
      %1134 = vmatpush.msra.mxu0 %v1069
      %1135 = vmatpush.msra.mxu0 %v1068
      %1136 = vmatpush.msra.mxu0 %v1067
      %1137 = vmatmul.f32.gmra.mxu0 %v1119
      %v1138 = vpop.f32.mrf.mxu0
      %v1139 = vadd.f32 0.0, %v1138
      %1140 = vdwg.mxu0
      %v1141 = vmax.f32 %v1139, 0.0
      %vm1142 = vcmask 122880
      %1143 = vst.msk [vmem:[%s473 + $0x3] sm:$0x1] %vm1142, %v1141
      %p1144 = scmp.lt.s32.totalorder %s21, 1
      %s1145 = scalar_select %p1144, %s21, 1
      %s1146 = smul.addr %s1145, 8
      %s1147 = smul.addr %s1146, 4
      %s1148 = scalar_lea.vmem %s9, %s1147
      // Predicated region
      $region57: #{sfocus_forward.1} parent=55 // pred_check
        %p1149 = pneg %p268
      $region58: #{sfocus_forward.1} parent=55 // pred_check_branch
        %1151 = sbr.rel (%p1149) target = $region60
      $region59: #{sfocus_forward.1} parent=55 // pred_region
        _
      $region60: #{sfocus_forward.1} parent=55 // pred_fallthru
        _
    $region56: #{sfocus_forward.1} parent=5 // pred_fallthru
      _
    %p1152 = scmp.le.s32.totalorder 2, %s16
    // Predicated region
    $region61: #{sfocus_forward.1} parent=5 // pred_check
      %p1153 = pneg %p1152
    $region62: #{sfocus_forward.1} parent=5 // pred_check_branch
      %1155 = sbr.rel (%p1153) target = $region64
    $region63: #{sfocus_forward.1} parent=5 // pred_region
      %s1156 = ssub.s32 %s16, 2
      // Predicated region
      $region65: #{sfocus_forward.1} parent=63 // pred_check
        %p1157 = pneg %p274
      $region66: #{sfocus_forward.1} parent=63 // pred_check_branch
        %1159 = sbr.rel (%p1157) target = $region68
      $region67: #{sfocus_forward.1} parent=63 // pred_region
        %p1160 = scmp.lt.s32.totalorder %s22, 1
        %s1161 = scalar_select %p1160, %s22, 1
        %s1162 = smul.addr %s1161, 8
        %s1163 = smul.addr %s1162, 4
        %s1164 = scalar_lea.vmem %s9, %s1163
      $region68: #{sfocus_forward.1} parent=63 // pred_fallthru
        _
    $region64: #{sfocus_forward.1} parent=5 // pred_fallthru
      _
  $region6: #{sfocus_forward.1} parent=0 // loop_footer
    %s20 = sadd.s32 1, %s16
  $region7: #{sfocus_forward.1} parent=0 // loop_footer_branch
    %15 = sbr.rel target = $region3
  $region8: #{sfocus_forward.1} parent=0 // loop_exit
    _

</llo_original>
